<compile_context>
chip_gen: v6e
topology: v6e:2x2x1
jax: 0.10.0
libtpu: 0.0.40
codegen_flags: <defaults>
</compile_context>

<pallas_src>
import functools

import jax
import jax.numpy as jnp
from jax.experimental import pallas as pl
from jax.experimental.pallas import tpu as pltpu


def _residual_block_kernel(x_ref, mask_ref, w1_ref, b1_ref, w2_ref, b2_ref,
                           out_ref, xpad_ref, *, W):
    """One batch image per grid step.

    x_ref    : (C, P)            input image, P = H*W (spatial flattened in lanes)
    mask_ref : (9, 1, P)         per-tap validity masks (f32 0/1)
    w1_ref   : (9, C, C)         conv1 tap matrices (Cout, Cin), tap t = kh*3+kw
    b1_ref   : (C, 1)            conv1 bias
    w2_ref   : (9, C, C)         conv2 tap matrices
    b2_ref   : (C, 1)            conv2 bias
    out_ref  : (C, P)            output image
    xpad_ref : (C, P + 2*(W+1))  f32 VMEM scratch: zero-padded shift buffer
    """
    C, P = x_ref.shape
    pad = W + 1

    x32 = x_ref[...].astype(jnp.float32)

    def conv3x3(w_ref, b_ref):
        acc = jnp.zeros((C, P), dtype=jnp.float32)
        t = 0
        for sdh in (-1, 0, 1):
            for sdw in (-1, 0, 1):
                off = sdh * W + sdw
                xs = xpad_ref[:, pl.ds(pad + off, P)]      # shifted window (C, P)
                xs = xs * mask_ref[t]                      # zero out-of-image pixels
                acc = acc + jnp.dot(w_ref[t], xs,
                                    preferred_element_type=jnp.float32)
                t += 1
        return acc + b_ref[...]

    # conv1 + bias + relu
    xpad_ref[...] = jnp.zeros_like(xpad_ref)
    xpad_ref[:, pl.ds(pad, P)] = x32
    mid = jnp.maximum(conv3x3(w1_ref, b1_ref), 0.0)

    # conv2 + bias + residual (scratch border is still zero; only interior rewritten)
    xpad_ref[:, pl.ds(pad, P)] = mid
    out = conv3x3(w2_ref, b2_ref) + x32

    out_ref[...] = out.astype(out_ref.dtype)


def residual_block_forward(x, w1, b1, w2, b2):
    """out = conv2(relu(conv1(x))) + x, both 3x3 convs, padding=1, with bias.

    x : (N, C, H, W) NCHW; w1, w2 : (C, C, 3, 3) OIHW; b1, b2 : (C,)
    Works for arbitrary N, C, H, W (no divisibility requirements).
    """
    N, C, H, W = x.shape
    assert w1.shape == (C, C, 3, 3) and w2.shape == (C, C, 3, 3)
    assert b1.shape == (C,) and b2.shape == (C,)
    P = H * W
    padp = P + 2 * (W + 1)

    # NCHW -> (N, C, H*W): channels in sublanes, flat spatial in lanes (lane-dense).
    x_flat = x.reshape(N, C, P)

    # Per-tap (Cout, Cin) matrices; tap t = kh*3 + kw, source offset (kh-1, kw-1).
    w1_taps = jnp.transpose(w1, (2, 3, 0, 1)).reshape(9, C, C)
    w2_taps = jnp.transpose(w2, (2, 3, 0, 1)).reshape(9, C, C)
    b1_col = b1.reshape(C, 1)
    b2_col = b2.reshape(C, 1)

    # Per-tap validity masks over flattened spatial positions (zero padding).
    hh = jnp.arange(P, dtype=jnp.int32) // W
    ww = jnp.arange(P, dtype=jnp.int32) % W
    mask_list = []
    for sdh in (-1, 0, 1):
        for sdw in (-1, 0, 1):
            valid = ((hh + sdh >= 0) & (hh + sdh < H) &
                     (ww + sdw >= 0) & (ww + sdw < W))
            mask_list.append(valid.astype(jnp.float32))
    masks = jnp.stack(mask_list, axis=0).reshape(9, 1, P)

    kernel = functools.partial(_residual_block_kernel, W=W)

    out_flat = pl.pallas_call(
        kernel,
        out_shape=jax.ShapeDtypeStruct((N, C, P), x.dtype),
        grid_spec=pltpu.PrefetchScalarGridSpec(
            num_scalar_prefetch=0,
            grid=(N,),
            in_specs=[
                pl.BlockSpec((None, C, P), lambda n: (n, 0, 0)),   # x (one image)
                pl.BlockSpec((9, 1, P), lambda n: (0, 0, 0)),      # masks
                pl.BlockSpec((9, C, C), lambda n: (0, 0, 0)),      # conv1 taps
                pl.BlockSpec((C, 1), lambda n: (0, 0)),            # conv1 bias
                pl.BlockSpec((9, C, C), lambda n: (0, 0, 0)),      # conv2 taps
                pl.BlockSpec((C, 1), lambda n: (0, 0)),            # conv2 bias
            ],
            out_specs=pl.BlockSpec((None, C, P), lambda n: (n, 0, 0)),
            scratch_shapes=[pltpu.VMEM((C, padp), jnp.float32)],
        ),
        compiler_params=pltpu.CompilerParams(
            dimension_semantics=("parallel",),
        ),
    )(x_flat, masks, w1_taps, b1_col, w2_taps, b2_col)

    return out_flat.reshape(N, C, H, W)


def _reference_forward(x, w1, b1, w2, b2):
    dn = ("NCHW", "OIHW", "NCHW")
    y = jax.lax.conv_general_dilated(
        x, w1, window_strides=(1, 1), padding=((1, 1), (1, 1)),
        dimension_numbers=dn, precision=jax.lax.Precision.HIGHEST)
    y = jnp.maximum(y + b1.reshape(1, -1, 1, 1), 0.0)
    z = jax.lax.conv_general_dilated(
        y, w2, window_strides=(1, 1), padding=((1, 1), (1, 1)),
        dimension_numbers=dn, precision=jax.lax.Precision.HIGHEST)
    return z + b2.reshape(1, -1, 1, 1) + x


if __name__ == "__main__":
    key = jax.random.PRNGKey(0)
    kx, kw1, kb1, kw2, kb2 = jax.random.split(key, 5)

    N, C, H, W = 2, 4, 16, 16
    x = jax.random.normal(kx, (N, C, H, W), dtype=jnp.float32)
    w1 = 0.1 * jax.random.normal(kw1, (C, C, 3, 3), dtype=jnp.float32)
    b1 = 0.1 * jax.random.normal(kb1, (C,), dtype=jnp.float32)
    w2 = 0.1 * jax.random.normal(kw2, (C, C, 3, 3), dtype=jnp.float32)
    b2 = 0.1 * jax.random.normal(kb2, (C,), dtype=jnp.float32)

    out = residual_block_forward(x, w1, b1, w2, b2)
    out = jax.block_until_ready(out)

    ref = _reference_forward(x, w1, b1, w2, b2)
    assert out.shape == ref.shape
    max_err = float(jnp.max(jnp.abs(out - ref)))
    assert jnp.allclose(out, ref, rtol=2e-3, atol=2e-3), max_err

    print("KERNEL_OK")
</pallas_src>

<mosaic_0001>
module attributes {stable_mosaic.version = 11 : i64} {
  func.func @_residual_block_kernel(%arg0: i32, %arg1: memref<1x4x256xf32, #tpu.memory_space<vmem>>, %arg2: memref<9x1x256xf32, #tpu.memory_space<vmem>>, %arg3: memref<9x4x4xf32, #tpu.memory_space<vmem>>, %arg4: memref<4x1xf32, #tpu.memory_space<vmem>>, %arg5: memref<9x4x4xf32, #tpu.memory_space<vmem>>, %arg6: memref<4x1xf32, #tpu.memory_space<vmem>>, %arg7: memref<1x4x256xf32, #tpu.memory_space<vmem>>, %arg8: memref<4x290xf32, #tpu.memory_space<vmem>>) attributes {dimension_semantics = [#tpu.dimension_semantics<parallel>], iteration_bounds = array<i64: 2>, scalar_prefetch = 0 : i64, scratch_operands = 1 : i64, tpu.core_type = #tpu.core_type<tc>, window_params = [{transform_indices = @transform_0, window_bounds = array<i64: 1, 4, 256>}, {pipeline_mode = #tpu.pipeline_mode<synchronous>, transform_indices = @transform_1, window_bounds = array<i64: 9, 1, 256>}, {pipeline_mode = #tpu.pipeline_mode<synchronous>, transform_indices = @transform_2, window_bounds = array<i64: 9, 4, 4>}, {pipeline_mode = #tpu.pipeline_mode<synchronous>, transform_indices = @transform_3, window_bounds = array<i64: 4, 1>}, {pipeline_mode = #tpu.pipeline_mode<synchronous>, transform_indices = @transform_4, window_bounds = array<i64: 9, 4, 4>}, {pipeline_mode = #tpu.pipeline_mode<synchronous>, transform_indices = @transform_5, window_bounds = array<i64: 4, 1>}, {transform_indices = @transform_6, window_bounds = array<i64: 1, 4, 256>}]} {
    %c0 = arith.constant 0 : index
    %c0_0 = arith.constant 0 : index
    %c0_1 = arith.constant 0 : index
    %0 = vector.load %arg1[%c0, %c0_0, %c0_1] : memref<1x4x256xf32, #tpu.memory_space<vmem>>, vector<1x4x256xf32>
    %1 = vector.shape_cast %0 : vector<1x4x256xf32> to vector<4x256xf32>
    %cst = arith.constant 0.000000e+00 : f32
    %2 = vector.broadcast %cst : f32 to vector<4x290xf32>
    %c0_2 = arith.constant 0 : index
    %c0_3 = arith.constant 0 : index
    %3 = vector.load %arg8[%c0_2, %c0_3] : memref<4x290xf32, #tpu.memory_space<vmem>>, vector<4x290xf32>
    tpu.vector_store %arg8[%c0_2, %c0_3], %2 {strides = array<i32>} : memref<4x290xf32, #tpu.memory_space<vmem>>, vector<4x290xf32>,
    %c0_4 = arith.constant 0 : index
    %c17 = arith.constant 17 : index
    %4 = vector.load %arg8[%c0_4, %c17] : memref<4x290xf32, #tpu.memory_space<vmem>>, vector<4x256xf32>
    tpu.vector_store %arg8[%c0_4, %c17], %1 {strides = array<i32>} : memref<4x290xf32, #tpu.memory_space<vmem>>, vector<4x256xf32>,
    %cst_5 = arith.constant 0.000000e+00 : f32
    %5 = vector.broadcast %cst_5 : f32 to vector<4x256xf32>
    %c0_6 = arith.constant 0 : index
    %c0_7 = arith.constant 0 : index
    %6 = vector.load %arg8[%c0_6, %c0_7] : memref<4x290xf32, #tpu.memory_space<vmem>>, vector<4x256xf32>
    %c0_8 = arith.constant 0 : index
    %c0_9 = arith.constant 0 : index
    %c0_10 = arith.constant 0 : index
    %7 = vector.load %arg2[%c0_8, %c0_9, %c0_10] : memref<9x1x256xf32, #tpu.memory_space<vmem>>, vector<1x1x256xf32>
    %8 = vector.shape_cast %7 : vector<1x1x256xf32> to vector<1x256xf32>
    %9 = vector.broadcast %8 : vector<1x256xf32> to vector<4x256xf32>
    %10 = arith.mulf %6, %9 : vector<4x256xf32>
    %c0_11 = arith.constant 0 : index
    %c0_12 = arith.constant 0 : index
    %c0_13 = arith.constant 0 : index
    %11 = vector.load %arg3[%c0_11, %c0_12, %c0_13] : memref<9x4x4xf32, #tpu.memory_space<vmem>>, vector<1x4x4xf32>
    %12 = vector.shape_cast %11 : vector<1x4x4xf32> to vector<4x4xf32>
    %cst_14 = arith.constant dense<0.000000e+00> : vector<4x256xf32>
    %13 = tpu.matmul %12, %10, %cst_14 {dimension_numbers = #tpu.dot_dimension_numbers<[1], [0], [0], [1], [0, 0, 1, 1], [], []>} : vector<4x4xf32>, vector<4x256xf32>, vector<4x256xf32> -> vector<4x256xf32>
    %14 = arith.addf %5, %13 : vector<4x256xf32>
    %c0_15 = arith.constant 0 : index
    %c1 = arith.constant 1 : index
    %15 = vector.load %arg8[%c0_15, %c1] : memref<4x290xf32, #tpu.memory_space<vmem>>, vector<4x256xf32>
    %c1_16 = arith.constant 1 : index
    %c0_17 = arith.constant 0 : index
    %c0_18 = arith.constant 0 : index
    %16 = vector.load %arg2[%c1_16, %c0_17, %c0_18] : memref<9x1x256xf32, #tpu.memory_space<vmem>>, vector<1x1x256xf32>
    %17 = vector.shape_cast %16 : vector<1x1x256xf32> to vector<1x256xf32>
    %18 = vector.broadcast %17 : vector<1x256xf32> to vector<4x256xf32>
    %19 = arith.mulf %15, %18 : vector<4x256xf32>
    %c1_19 = arith.constant 1 : index
    %c0_20 = arith.constant 0 : index
    %c0_21 = arith.constant 0 : index
    %20 = vector.load %arg3[%c1_19, %c0_20, %c0_21] : memref<9x4x4xf32, #tpu.memory_space<vmem>>, vector<1x4x4xf32>
    %21 = vector.shape_cast %20 : vector<1x4x4xf32> to vector<4x4xf32>
    %cst_22 = arith.constant dense<0.000000e+00> : vector<4x256xf32>
    %22 = tpu.matmul %21, %19, %cst_22 {dimension_numbers = #tpu.dot_dimension_numbers<[1], [0], [0], [1], [0, 0, 1, 1], [], []>} : vector<4x4xf32>, vector<4x256xf32>, vector<4x256xf32> -> vector<4x256xf32>
    %23 = arith.addf %14, %22 : vector<4x256xf32>
    %c0_23 = arith.constant 0 : index
    %c2 = arith.constant 2 : index
    %24 = vector.load %arg8[%c0_23, %c2] : memref<4x290xf32, #tpu.memory_space<vmem>>, vector<4x256xf32>
    %c2_24 = arith.constant 2 : index
    %c0_25 = arith.constant 0 : index
    %c0_26 = arith.constant 0 : index
    %25 = vector.load %arg2[%c2_24, %c0_25, %c0_26] : memref<9x1x256xf32, #tpu.memory_space<vmem>>, vector<1x1x256xf32>
    %26 = vector.shape_cast %25 : vector<1x1x256xf32> to vector<1x256xf32>
    %27 = vector.broadcast %26 : vector<1x256xf32> to vector<4x256xf32>
    %28 = arith.mulf %24, %27 : vector<4x256xf32>
    %c2_27 = arith.constant 2 : index
    %c0_28 = arith.constant 0 : index
    %c0_29 = arith.constant 0 : index
    %29 = vector.load %arg3[%c2_27, %c0_28, %c0_29] : memref<9x4x4xf32, #tpu.memory_space<vmem>>, vector<1x4x4xf32>
    %30 = vector.shape_cast %29 : vector<1x4x4xf32> to vector<4x4xf32>
    %cst_30 = arith.constant dense<0.000000e+00> : vector<4x256xf32>
    %31 = tpu.matmul %30, %28, %cst_30 {dimension_numbers = #tpu.dot_dimension_numbers<[1], [0], [0], [1], [0, 0, 1, 1], [], []>} : vector<4x4xf32>, vector<4x256xf32>, vector<4x256xf32> -> vector<4x256xf32>
    %32 = arith.addf %23, %31 : vector<4x256xf32>
    %c0_31 = arith.constant 0 : index
    %c16 = arith.constant 16 : index
    %33 = vector.load %arg8[%c0_31, %c16] : memref<4x290xf32, #tpu.memory_space<vmem>>, vector<4x256xf32>
    %c3 = arith.constant 3 : index
    %c0_32 = arith.constant 0 : index
    %c0_33 = arith.constant 0 : index
    %34 = vector.load %arg2[%c3, %c0_32, %c0_33] : memref<9x1x256xf32, #tpu.memory_space<vmem>>, vector<1x1x256xf32>
    %35 = vector.shape_cast %34 : vector<1x1x256xf32> to vector<1x256xf32>
    %36 = vector.broadcast %35 : vector<1x256xf32> to vector<4x256xf32>
    %37 = arith.mulf %33, %36 : vector<4x256xf32>
    %c3_34 = arith.constant 3 : index
    %c0_35 = arith.constant 0 : index
    %c0_36 = arith.constant 0 : index
    %38 = vector.load %arg3[%c3_34, %c0_35, %c0_36] : memref<9x4x4xf32, #tpu.memory_space<vmem>>, vector<1x4x4xf32>
    %39 = vector.shape_cast %38 : vector<1x4x4xf32> to vector<4x4xf32>
    %cst_37 = arith.constant dense<0.000000e+00> : vector<4x256xf32>
    %40 = tpu.matmul %39, %37, %cst_37 {dimension_numbers = #tpu.dot_dimension_numbers<[1], [0], [0], [1], [0, 0, 1, 1], [], []>} : vector<4x4xf32>, vector<4x256xf32>, vector<4x256xf32> -> vector<4x256xf32>
    %41 = arith.addf %32, %40 : vector<4x256xf32>
    %c0_38 = arith.constant 0 : index
    %c17_39 = arith.constant 17 : index
    %42 = vector.load %arg8[%c0_38, %c17_39] : memref<4x290xf32, #tpu.memory_space<vmem>>, vector<4x256xf32>
    %c4 = arith.constant 4 : index
    %c0_40 = arith.constant 0 : index
    %c0_41 = arith.constant 0 : index
    %43 = vector.load %arg2[%c4, %c0_40, %c0_41] : memref<9x1x256xf32, #tpu.memory_space<vmem>>, vector<1x1x256xf32>
    %44 = vector.shape_cast %43 : vector<1x1x256xf32> to vector<1x256xf32>
    %45 = vector.broadcast %44 : vector<1x256xf32> to vector<4x256xf32>
    %46 = arith.mulf %42, %45 : vector<4x256xf32>
    %c4_42 = arith.constant 4 : index
    %c0_43 = arith.constant 0 : index
    %c0_44 = arith.constant 0 : index
    %47 = vector.load %arg3[%c4_42, %c0_43, %c0_44] : memref<9x4x4xf32, #tpu.memory_space<vmem>>, vector<1x4x4xf32>
    %48 = vector.shape_cast %47 : vector<1x4x4xf32> to vector<4x4xf32>
    %cst_45 = arith.constant dense<0.000000e+00> : vector<4x256xf32>
    %49 = tpu.matmul %48, %46, %cst_45 {dimension_numbers = #tpu.dot_dimension_numbers<[1], [0], [0], [1], [0, 0, 1, 1], [], []>} : vector<4x4xf32>, vector<4x256xf32>, vector<4x256xf32> -> vector<4x256xf32>
    %50 = arith.addf %41, %49 : vector<4x256xf32>
    %c0_46 = arith.constant 0 : index
    %c18 = arith.constant 18 : index
    %51 = vector.load %arg8[%c0_46, %c18] : memref<4x290xf32, #tpu.memory_space<vmem>>, vector<4x256xf32>
    %c5 = arith.constant 5 : index
    %c0_47 = arith.constant 0 : index
    %c0_48 = arith.constant 0 : index
    %52 = vector.load %arg2[%c5, %c0_47, %c0_48] : memref<9x1x256xf32, #tpu.memory_space<vmem>>, vector<1x1x256xf32>
    %53 = vector.shape_cast %52 : vector<1x1x256xf32> to vector<1x256xf32>
    %54 = vector.broadcast %53 : vector<1x256xf32> to vector<4x256xf32>
    %55 = arith.mulf %51, %54 : vector<4x256xf32>
    %c5_49 = arith.constant 5 : index
    %c0_50 = arith.constant 0 : index
    %c0_51 = arith.constant 0 : index
    %56 = vector.load %arg3[%c5_49, %c0_50, %c0_51] : memref<9x4x4xf32, #tpu.memory_space<vmem>>, vector<1x4x4xf32>
    %57 = vector.shape_cast %56 : vector<1x4x4xf32> to vector<4x4xf32>
    %cst_52 = arith.constant dense<0.000000e+00> : vector<4x256xf32>
    %58 = tpu.matmul %57, %55, %cst_52 {dimension_numbers = #tpu.dot_dimension_numbers<[1], [0], [0], [1], [0, 0, 1, 1], [], []>} : vector<4x4xf32>, vector<4x256xf32>, vector<4x256xf32> -> vector<4x256xf32>
    %59 = arith.addf %50, %58 : vector<4x256xf32>
    %c0_53 = arith.constant 0 : index
    %c32 = arith.constant 32 : index
    %60 = vector.load %arg8[%c0_53, %c32] : memref<4x290xf32, #tpu.memory_space<vmem>>, vector<4x256xf32>
    %c6 = arith.constant 6 : index
    %c0_54 = arith.constant 0 : index
    %c0_55 = arith.constant 0 : index
    %61 = vector.load %arg2[%c6, %c0_54, %c0_55] : memref<9x1x256xf32, #tpu.memory_space<vmem>>, vector<1x1x256xf32>
    %62 = vector.shape_cast %61 : vector<1x1x256xf32> to vector<1x256xf32>
    %63 = vector.broadcast %62 : vector<1x256xf32> to vector<4x256xf32>
    %64 = arith.mulf %60, %63 : vector<4x256xf32>
    %c6_56 = arith.constant 6 : index
    %c0_57 = arith.constant 0 : index
    %c0_58 = arith.constant 0 : index
    %65 = vector.load %arg3[%c6_56, %c0_57, %c0_58] : memref<9x4x4xf32, #tpu.memory_space<vmem>>, vector<1x4x4xf32>
    %66 = vector.shape_cast %65 : vector<1x4x4xf32> to vector<4x4xf32>
    %cst_59 = arith.constant dense<0.000000e+00> : vector<4x256xf32>
    %67 = tpu.matmul %66, %64, %cst_59 {dimension_numbers = #tpu.dot_dimension_numbers<[1], [0], [0], [1], [0, 0, 1, 1], [], []>} : vector<4x4xf32>, vector<4x256xf32>, vector<4x256xf32> -> vector<4x256xf32>
    %68 = arith.addf %59, %67 : vector<4x256xf32>
    %c0_60 = arith.constant 0 : index
    %c33 = arith.constant 33 : index
    %69 = vector.load %arg8[%c0_60, %c33] : memref<4x290xf32, #tpu.memory_space<vmem>>, vector<4x256xf32>
    %c7 = arith.constant 7 : index
    %c0_61 = arith.constant 0 : index
    %c0_62 = arith.constant 0 : index
    %70 = vector.load %arg2[%c7, %c0_61, %c0_62] : memref<9x1x256xf32, #tpu.memory_space<vmem>>, vector<1x1x256xf32>
    %71 = vector.shape_cast %70 : vector<1x1x256xf32> to vector<1x256xf32>
    %72 = vector.broadcast %71 : vector<1x256xf32> to vector<4x256xf32>
    %73 = arith.mulf %69, %72 : vector<4x256xf32>
    %c7_63 = arith.constant 7 : index
    %c0_64 = arith.constant 0 : index
    %c0_65 = arith.constant 0 : index
    %74 = vector.load %arg3[%c7_63, %c0_64, %c0_65] : memref<9x4x4xf32, #tpu.memory_space<vmem>>, vector<1x4x4xf32>
    %75 = vector.shape_cast %74 : vector<1x4x4xf32> to vector<4x4xf32>
    %cst_66 = arith.constant dense<0.000000e+00> : vector<4x256xf32>
    %76 = tpu.matmul %75, %73, %cst_66 {dimension_numbers = #tpu.dot_dimension_numbers<[1], [0], [0], [1], [0, 0, 1, 1], [], []>} : vector<4x4xf32>, vector<4x256xf32>, vector<4x256xf32> -> vector<4x256xf32>
    %77 = arith.addf %68, %76 : vector<4x256xf32>
    %c0_67 = arith.constant 0 : index
    %c34 = arith.constant 34 : index
    %78 = vector.load %arg8[%c0_67, %c34] : memref<4x290xf32, #tpu.memory_space<vmem>>, vector<4x256xf32>
    %c8 = arith.constant 8 : index
    %c0_68 = arith.constant 0 : index
    %c0_69 = arith.constant 0 : index
    %79 = vector.load %arg2[%c8, %c0_68, %c0_69] : memref<9x1x256xf32, #tpu.memory_space<vmem>>, vector<1x1x256xf32>
    %80 = vector.shape_cast %79 : vector<1x1x256xf32> to vector<1x256xf32>
    %81 = vector.broadcast %80 : vector<1x256xf32> to vector<4x256xf32>
    %82 = arith.mulf %78, %81 : vector<4x256xf32>
    %c8_70 = arith.constant 8 : index
    %c0_71 = arith.constant 0 : index
    %c0_72 = arith.constant 0 : index
    %83 = vector.load %arg3[%c8_70, %c0_71, %c0_72] : memref<9x4x4xf32, #tpu.memory_space<vmem>>, vector<1x4x4xf32>
    %84 = vector.shape_cast %83 : vector<1x4x4xf32> to vector<4x4xf32>
    %cst_73 = arith.constant dense<0.000000e+00> : vector<4x256xf32>
    %85 = tpu.matmul %84, %82, %cst_73 {dimension_numbers = #tpu.dot_dimension_numbers<[1], [0], [0], [1], [0, 0, 1, 1], [], []>} : vector<4x4xf32>, vector<4x256xf32>, vector<4x256xf32> -> vector<4x256xf32>
    %86 = arith.addf %77, %85 : vector<4x256xf32>
    %c0_74 = arith.constant 0 : index
    %c0_75 = arith.constant 0 : index
    %87 = vector.load %arg4[%c0_74, %c0_75] : memref<4x1xf32, #tpu.memory_space<vmem>>, vector<4x1xf32>
    %88 = vector.broadcast %87 : vector<4x1xf32> to vector<4x256xf32>
    %89 = arith.addf %86, %88 : vector<4x256xf32>
    %cst_76 = arith.constant 0.000000e+00 : f32
    %90 = vector.broadcast %cst_76 : f32 to vector<4x256xf32>
    %91 = arith.maximumf %89, %90 : vector<4x256xf32>
    %c0_77 = arith.constant 0 : index
    %c17_78 = arith.constant 17 : index
    %92 = vector.load %arg8[%c0_77, %c17_78] : memref<4x290xf32, #tpu.memory_space<vmem>>, vector<4x256xf32>
    tpu.vector_store %arg8[%c0_77, %c17_78], %91 {strides = array<i32>} : memref<4x290xf32, #tpu.memory_space<vmem>>, vector<4x256xf32>,
    %cst_79 = arith.constant 0.000000e+00 : f32
    %93 = vector.broadcast %cst_79 : f32 to vector<4x256xf32>
    %c0_80 = arith.constant 0 : index
    %c0_81 = arith.constant 0 : index
    %94 = vector.load %arg8[%c0_80, %c0_81] : memref<4x290xf32, #tpu.memory_space<vmem>>, vector<4x256xf32>
    %c0_82 = arith.constant 0 : index
    %c0_83 = arith.constant 0 : index
    %c0_84 = arith.constant 0 : index
    %95 = vector.load %arg2[%c0_82, %c0_83, %c0_84] : memref<9x1x256xf32, #tpu.memory_space<vmem>>, vector<1x1x256xf32>
    %96 = vector.shape_cast %95 : vector<1x1x256xf32> to vector<1x256xf32>
    %97 = vector.broadcast %96 : vector<1x256xf32> to vector<4x256xf32>
    %98 = arith.mulf %94, %97 : vector<4x256xf32>
    %c0_85 = arith.constant 0 : index
    %c0_86 = arith.constant 0 : index
    %c0_87 = arith.constant 0 : index
    %99 = vector.load %arg5[%c0_85, %c0_86, %c0_87] : memref<9x4x4xf32, #tpu.memory_space<vmem>>, vector<1x4x4xf32>
    %100 = vector.shape_cast %99 : vector<1x4x4xf32> to vector<4x4xf32>
    %cst_88 = arith.constant dense<0.000000e+00> : vector<4x256xf32>
    %101 = tpu.matmul %100, %98, %cst_88 {dimension_numbers = #tpu.dot_dimension_numbers<[1], [0], [0], [1], [0, 0, 1, 1], [], []>} : vector<4x4xf32>, vector<4x256xf32>, vector<4x256xf32> -> vector<4x256xf32>
    %102 = arith.addf %93, %101 : vector<4x256xf32>
    %c0_89 = arith.constant 0 : index
    %c1_90 = arith.constant 1 : index
    %103 = vector.load %arg8[%c0_89, %c1_90] : memref<4x290xf32, #tpu.memory_space<vmem>>, vector<4x256xf32>
    %c1_91 = arith.constant 1 : index
    %c0_92 = arith.constant 0 : index
    %c0_93 = arith.constant 0 : index
    %104 = vector.load %arg2[%c1_91, %c0_92, %c0_93] : memref<9x1x256xf32, #tpu.memory_space<vmem>>, vector<1x1x256xf32>
    %105 = vector.shape_cast %104 : vector<1x1x256xf32> to vector<1x256xf32>
    %106 = vector.broadcast %105 : vector<1x256xf32> to vector<4x256xf32>
    %107 = arith.mulf %103, %106 : vector<4x256xf32>
    %c1_94 = arith.constant 1 : index
    %c0_95 = arith.constant 0 : index
    %c0_96 = arith.constant 0 : index
    %108 = vector.load %arg5[%c1_94, %c0_95, %c0_96] : memref<9x4x4xf32, #tpu.memory_space<vmem>>, vector<1x4x4xf32>
    %109 = vector.shape_cast %108 : vector<1x4x4xf32> to vector<4x4xf32>
    %cst_97 = arith.constant dense<0.000000e+00> : vector<4x256xf32>
    %110 = tpu.matmul %109, %107, %cst_97 {dimension_numbers = #tpu.dot_dimension_numbers<[1], [0], [0], [1], [0, 0, 1, 1], [], []>} : vector<4x4xf32>, vector<4x256xf32>, vector<4x256xf32> -> vector<4x256xf32>
    %111 = arith.addf %102, %110 : vector<4x256xf32>
    %c0_98 = arith.constant 0 : index
    %c2_99 = arith.constant 2 : index
    %112 = vector.load %arg8[%c0_98, %c2_99] : memref<4x290xf32, #tpu.memory_space<vmem>>, vector<4x256xf32>
    %c2_100 = arith.constant 2 : index
    %c0_101 = arith.constant 0 : index
    %c0_102 = arith.constant 0 : index
    %113 = vector.load %arg2[%c2_100, %c0_101, %c0_102] : memref<9x1x256xf32, #tpu.memory_space<vmem>>, vector<1x1x256xf32>
    %114 = vector.shape_cast %113 : vector<1x1x256xf32> to vector<1x256xf32>
    %115 = vector.broadcast %114 : vector<1x256xf32> to vector<4x256xf32>
    %116 = arith.mulf %112, %115 : vector<4x256xf32>
    %c2_103 = arith.constant 2 : index
    %c0_104 = arith.constant 0 : index
    %c0_105 = arith.constant 0 : index
    %117 = vector.load %arg5[%c2_103, %c0_104, %c0_105] : memref<9x4x4xf32, #tpu.memory_space<vmem>>, vector<1x4x4xf32>
    %118 = vector.shape_cast %117 : vector<1x4x4xf32> to vector<4x4xf32>
    %cst_106 = arith.constant dense<0.000000e+00> : vector<4x256xf32>
    %119 = tpu.matmul %118, %116, %cst_106 {dimension_numbers = #tpu.dot_dimension_numbers<[1], [0], [0], [1], [0, 0, 1, 1], [], []>} : vector<4x4xf32>, vector<4x256xf32>, vector<4x256xf32> -> vector<4x256xf32>
    %120 = arith.addf %111, %119 : vector<4x256xf32>
    %c0_107 = arith.constant 0 : index
    %c16_108 = arith.constant 16 : index
    %121 = vector.load %arg8[%c0_107, %c16_108] : memref<4x290xf32, #tpu.memory_space<vmem>>, vector<4x256xf32>
    %c3_109 = arith.constant 3 : index
    %c0_110 = arith.constant 0 : index
    %c0_111 = arith.constant 0 : index
    %122 = vector.load %arg2[%c3_109, %c0_110, %c0_111] : memref<9x1x256xf32, #tpu.memory_space<vmem>>, vector<1x1x256xf32>
    %123 = vector.shape_cast %122 : vector<1x1x256xf32> to vector<1x256xf32>
    %124 = vector.broadcast %123 : vector<1x256xf32> to vector<4x256xf32>
    %125 = arith.mulf %121, %124 : vector<4x256xf32>
    %c3_112 = arith.constant 3 : index
    %c0_113 = arith.constant 0 : index
    %c0_114 = arith.constant 0 : index
    %126 = vector.load %arg5[%c3_112, %c0_113, %c0_114] : memref<9x4x4xf32, #tpu.memory_space<vmem>>, vector<1x4x4xf32>
    %127 = vector.shape_cast %126 : vector<1x4x4xf32> to vector<4x4xf32>
    %cst_115 = arith.constant dense<0.000000e+00> : vector<4x256xf32>
    %128 = tpu.matmul %127, %125, %cst_115 {dimension_numbers = #tpu.dot_dimension_numbers<[1], [0], [0], [1], [0, 0, 1, 1], [], []>} : vector<4x4xf32>, vector<4x256xf32>, vector<4x256xf32> -> vector<4x256xf32>
    %129 = arith.addf %120, %128 : vector<4x256xf32>
    %c0_116 = arith.constant 0 : index
    %c17_117 = arith.constant 17 : index
    %130 = vector.load %arg8[%c0_116, %c17_117] : memref<4x290xf32, #tpu.memory_space<vmem>>, vector<4x256xf32>
    %c4_118 = arith.constant 4 : index
    %c0_119 = arith.constant 0 : index
    %c0_120 = arith.constant 0 : index
    %131 = vector.load %arg2[%c4_118, %c0_119, %c0_120] : memref<9x1x256xf32, #tpu.memory_space<vmem>>, vector<1x1x256xf32>
    %132 = vector.shape_cast %131 : vector<1x1x256xf32> to vector<1x256xf32>
    %133 = vector.broadcast %132 : vector<1x256xf32> to vector<4x256xf32>
    %134 = arith.mulf %130, %133 : vector<4x256xf32>
    %c4_121 = arith.constant 4 : index
    %c0_122 = arith.constant 0 : index
    %c0_123 = arith.constant 0 : index
    %135 = vector.load %arg5[%c4_121, %c0_122, %c0_123] : memref<9x4x4xf32, #tpu.memory_space<vmem>>, vector<1x4x4xf32>
    %136 = vector.shape_cast %135 : vector<1x4x4xf32> to vector<4x4xf32>
    %cst_124 = arith.constant dense<0.000000e+00> : vector<4x256xf32>
    %137 = tpu.matmul %136, %134, %cst_124 {dimension_numbers = #tpu.dot_dimension_numbers<[1], [0], [0], [1], [0, 0, 1, 1], [], []>} : vector<4x4xf32>, vector<4x256xf32>, vector<4x256xf32> -> vector<4x256xf32>
    %138 = arith.addf %129, %137 : vector<4x256xf32>
    %c0_125 = arith.constant 0 : index
    %c18_126 = arith.constant 18 : index
    %139 = vector.load %arg8[%c0_125, %c18_126] : memref<4x290xf32, #tpu.memory_space<vmem>>, vector<4x256xf32>
    %c5_127 = arith.constant 5 : index
    %c0_128 = arith.constant 0 : index
    %c0_129 = arith.constant 0 : index
    %140 = vector.load %arg2[%c5_127, %c0_128, %c0_129] : memref<9x1x256xf32, #tpu.memory_space<vmem>>, vector<1x1x256xf32>
    %141 = vector.shape_cast %140 : vector<1x1x256xf32> to vector<1x256xf32>
    %142 = vector.broadcast %141 : vector<1x256xf32> to vector<4x256xf32>
    %143 = arith.mulf %139, %142 : vector<4x256xf32>
    %c5_130 = arith.constant 5 : index
    %c0_131 = arith.constant 0 : index
    %c0_132 = arith.constant 0 : index
    %144 = vector.load %arg5[%c5_130, %c0_131, %c0_132] : memref<9x4x4xf32, #tpu.memory_space<vmem>>, vector<1x4x4xf32>
    %145 = vector.shape_cast %144 : vector<1x4x4xf32> to vector<4x4xf32>
    %cst_133 = arith.constant dense<0.000000e+00> : vector<4x256xf32>
    %146 = tpu.matmul %145, %143, %cst_133 {dimension_numbers = #tpu.dot_dimension_numbers<[1], [0], [0], [1], [0, 0, 1, 1], [], []>} : vector<4x4xf32>, vector<4x256xf32>, vector<4x256xf32> -> vector<4x256xf32>
    %147 = arith.addf %138, %146 : vector<4x256xf32>
    %c0_134 = arith.constant 0 : index
    %c32_135 = arith.constant 32 : index
    %148 = vector.load %arg8[%c0_134, %c32_135] : memref<4x290xf32, #tpu.memory_space<vmem>>, vector<4x256xf32>
    %c6_136 = arith.constant 6 : index
    %c0_137 = arith.constant 0 : index
    %c0_138 = arith.constant 0 : index
    %149 = vector.load %arg2[%c6_136, %c0_137, %c0_138] : memref<9x1x256xf32, #tpu.memory_space<vmem>>, vector<1x1x256xf32>
    %150 = vector.shape_cast %149 : vector<1x1x256xf32> to vector<1x256xf32>
    %151 = vector.broadcast %150 : vector<1x256xf32> to vector<4x256xf32>
    %152 = arith.mulf %148, %151 : vector<4x256xf32>
    %c6_139 = arith.constant 6 : index
    %c0_140 = arith.constant 0 : index
    %c0_141 = arith.constant 0 : index
    %153 = vector.load %arg5[%c6_139, %c0_140, %c0_141] : memref<9x4x4xf32, #tpu.memory_space<vmem>>, vector<1x4x4xf32>
    %154 = vector.shape_cast %153 : vector<1x4x4xf32> to vector<4x4xf32>
    %cst_142 = arith.constant dense<0.000000e+00> : vector<4x256xf32>
    %155 = tpu.matmul %154, %152, %cst_142 {dimension_numbers = #tpu.dot_dimension_numbers<[1], [0], [0], [1], [0, 0, 1, 1], [], []>} : vector<4x4xf32>, vector<4x256xf32>, vector<4x256xf32> -> vector<4x256xf32>
    %156 = arith.addf %147, %155 : vector<4x256xf32>
    %c0_143 = arith.constant 0 : index
    %c33_144 = arith.constant 33 : index
    %157 = vector.load %arg8[%c0_143, %c33_144] : memref<4x290xf32, #tpu.memory_space<vmem>>, vector<4x256xf32>
    %c7_145 = arith.constant 7 : index
    %c0_146 = arith.constant 0 : index
    %c0_147 = arith.constant 0 : index
    %158 = vector.load %arg2[%c7_145, %c0_146, %c0_147] : memref<9x1x256xf32, #tpu.memory_space<vmem>>, vector<1x1x256xf32>
    %159 = vector.shape_cast %158 : vector<1x1x256xf32> to vector<1x256xf32>
    %160 = vector.broadcast %159 : vector<1x256xf32> to vector<4x256xf32>
    %161 = arith.mulf %157, %160 : vector<4x256xf32>
    %c7_148 = arith.constant 7 : index
    %c0_149 = arith.constant 0 : index
    %c0_150 = arith.constant 0 : index
    %162 = vector.load %arg5[%c7_148, %c0_149, %c0_150] : memref<9x4x4xf32, #tpu.memory_space<vmem>>, vector<1x4x4xf32>
    %163 = vector.shape_cast %162 : vector<1x4x4xf32> to vector<4x4xf32>
    %cst_151 = arith.constant dense<0.000000e+00> : vector<4x256xf32>
    %164 = tpu.matmul %163, %161, %cst_151 {dimension_numbers = #tpu.dot_dimension_numbers<[1], [0], [0], [1], [0, 0, 1, 1], [], []>} : vector<4x4xf32>, vector<4x256xf32>, vector<4x256xf32> -> vector<4x256xf32>
    %165 = arith.addf %156, %164 : vector<4x256xf32>
    %c0_152 = arith.constant 0 : index
    %c34_153 = arith.constant 34 : index
    %166 = vector.load %arg8[%c0_152, %c34_153] : memref<4x290xf32, #tpu.memory_space<vmem>>, vector<4x256xf32>
    %c8_154 = arith.constant 8 : index
    %c0_155 = arith.constant 0 : index
    %c0_156 = arith.constant 0 : index
    %167 = vector.load %arg2[%c8_154, %c0_155, %c0_156] : memref<9x1x256xf32, #tpu.memory_space<vmem>>, vector<1x1x256xf32>
    %168 = vector.shape_cast %167 : vector<1x1x256xf32> to vector<1x256xf32>
    %169 = vector.broadcast %168 : vector<1x256xf32> to vector<4x256xf32>
    %170 = arith.mulf %166, %169 : vector<4x256xf32>
    %c8_157 = arith.constant 8 : index
    %c0_158 = arith.constant 0 : index
    %c0_159 = arith.constant 0 : index
    %171 = vector.load %arg5[%c8_157, %c0_158, %c0_159] : memref<9x4x4xf32, #tpu.memory_space<vmem>>, vector<1x4x4xf32>
    %172 = vector.shape_cast %171 : vector<1x4x4xf32> to vector<4x4xf32>
    %cst_160 = arith.constant dense<0.000000e+00> : vector<4x256xf32>
    %173 = tpu.matmul %172, %170, %cst_160 {dimension_numbers = #tpu.dot_dimension_numbers<[1], [0], [0], [1], [0, 0, 1, 1], [], []>} : vector<4x4xf32>, vector<4x256xf32>, vector<4x256xf32> -> vector<4x256xf32>
    %174 = arith.addf %165, %173 : vector<4x256xf32>
    %c0_161 = arith.constant 0 : index
    %c0_162 = arith.constant 0 : index
    %175 = vector.load %arg6[%c0_161, %c0_162] : memref<4x1xf32, #tpu.memory_space<vmem>>, vector<4x1xf32>
    %176 = vector.broadcast %175 : vector<4x1xf32> to vector<4x256xf32>
    %177 = arith.addf %174, %176 : vector<4x256xf32>
    %178 = arith.addf %177, %1 : vector<4x256xf32>
    %c0_163 = arith.constant 0 : index
    %c0_164 = arith.constant 0 : index
    %c0_165 = arith.constant 0 : index
    %179 = vector.load %arg7[%c0_163, %c0_164, %c0_165] : memref<1x4x256xf32, #tpu.memory_space<vmem>>, vector<1x4x256xf32>
    %180 = vector.shape_cast %179 : vector<1x4x256xf32> to vector<4x256xf32>
    %181 = vector.shape_cast %178 : vector<4x256xf32> to vector<1x4x256xf32>
    tpu.vector_store %arg7[%c0_163, %c0_164, %c0_165], %181 {strides = array<i32>} : memref<1x4x256xf32, #tpu.memory_space<vmem>>, vector<1x4x256xf32>,
    return
  }
  func.func @transform_0(%arg0: i32) -> (i32, i32, i32) {
    %c0_i32 = arith.constant 0 : i32
    %c0_i32_0 = arith.constant 0 : i32
    %c0_i32_1 = arith.constant 0 : i32
    return %arg0, %c0_i32, %c0_i32_0 : i32, i32, i32
  }
  func.func @transform_1(%arg0: i32) -> (i32, i32, i32) {
    %c0_i32 = arith.constant 0 : i32
    %c0_i32_0 = arith.constant 0 : i32
    %c0_i32_1 = arith.constant 0 : i32
    %c0_i32_2 = arith.constant 0 : i32
    return %c0_i32, %c0_i32_0, %c0_i32_1 : i32, i32, i32
  }
  func.func @transform_2(%arg0: i32) -> (i32, i32, i32) {
    %c0_i32 = arith.constant 0 : i32
    %c0_i32_0 = arith.constant 0 : i32
    %c0_i32_1 = arith.constant 0 : i32
    %c0_i32_2 = arith.constant 0 : i32
    return %c0_i32, %c0_i32_0, %c0_i32_1 : i32, i32, i32
  }
  func.func @transform_3(%arg0: i32) -> (i32, i32) {
    %c0_i32 = arith.constant 0 : i32
    %c0_i32_0 = arith.constant 0 : i32
    %c0_i32_1 = arith.constant 0 : i32
    return %c0_i32, %c0_i32_0 : i32, i32
  }
  func.func @transform_4(%arg0: i32) -> (i32, i32, i32) {
    %c0_i32 = arith.constant 0 : i32
    %c0_i32_0 = arith.constant 0 : i32
    %c0_i32_1 = arith.constant 0 : i32
    %c0_i32_2 = arith.constant 0 : i32
    return %c0_i32, %c0_i32_0, %c0_i32_1 : i32, i32, i32
  }
  func.func @transform_5(%arg0: i32) -> (i32, i32) {
    %c0_i32 = arith.constant 0 : i32
    %c0_i32_0 = arith.constant 0 : i32
    %c0_i32_1 = arith.constant 0 : i32
    return %c0_i32, %c0_i32_0 : i32, i32
  }
  func.func @transform_6(%arg0: i32) -> (i32, i32, i32) {
    %c0_i32 = arith.constant 0 : i32
    %c0_i32_0 = arith.constant 0 : i32
    %c0_i32_1 = arith.constant 0 : i32
    return %arg0, %c0_i32, %c0_i32_0 : i32, i32, i32
  }
}

</mosaic_0001>

<llo_original>
// kernel: tpu_custom_call.1
$region0: #{tpu_custom_call.1}
  #allocation0 [shape = 'u32[]', space=smem, size = 0x4, offset = 0x4, fixed_abs, tag = 'smem constant byte address 0x4 - core index']
  #allocation1 [shape = 'u32[144,128]{1,0:T(1,128)}', space=vmem, size = 0x12000, scoped, tag = 'internal scratch']
  #allocation2 [shape = 'f32[4,290]{1,0:T(4,128)}', space=vmem, size = 0x1800, scoped, tag = 'scratch operand']
  %s0 = inlined_call_operand.vmem [shape: f32[2,4,256], index: 0, kind: input, shape index: {}]
  %s1 = inlined_call_operand.vmem [shape: f32[9,1,256], index: 1, kind: input, shape index: {}]
  %s2 = inlined_call_operand.vmem [shape: f32[9,4,4], index: 2, kind: input, shape index: {}]
  %s3 = inlined_call_operand.vmem [shape: f32[4,1], index: 3, kind: input, shape index: {}]
  %s4 = inlined_call_operand.vmem [shape: f32[9,4,4], index: 4, kind: input, shape index: {}]
  %s5 = inlined_call_operand.vmem [shape: f32[4,1], index: 5, kind: input, shape index: {}]
  %s6 = inlined_call_operand.hbm [shape: f32[2,4,256], index: 6, kind: output, shape index: {}]
  %s7 = sld [smem:[#allocation0]]
  $region57: #{tpu_custom_call.1} parent=0
    _
  %s9 = ssub.s32 1, %s7
  %s10 = scalar_select 0, %s9, %s7
  $region1: #{tpu_custom_call.1} parent=0
    #allocation3 [shape = 'u8[8192]{0}', space=vmem, size = 0x2000, scoped, tag = 'output window, operand 0']
    #allocation4 [shape = 's32[2]{0}', space=sflag, size = 0x8, scoped, tag = 'scoped memory for tpu_custom_call.1']
    %11 = vsyncpa [#allocation4], 0
    %s12 = scalar_lea.sflag [#allocation4], 1
    %13 = vsyncpa %s12, 0
    loop: start=0, step=1, limit=4
    $region2: #{tpu_custom_call.1} parent=1 // loop_pre_header
      _
    $region3: #{tpu_custom_call.1} parent=1 // loop_header
      %s15 = sphi 0, %s19
      %p16 = scmp.ge.s32.totalorder %s15, 4
      %s25 = sphi 0, %s27
      %s28 = sphi 0, %s25
      %s29 = sphi 0, %s28
      %s45 = sphi 0, %s29
      %s49 = sphi 0, %s49
      %s51 = sphi 0, %s49
      %s52 = sphi 0, %s51
      %s66 = sphi 0, %s52
      %s70 = sphi 0, %s70
      %s72 = sphi 0, %s70
      %s73 = sphi 0, %s72
      %s87 = sphi 0, %s73
      %s91 = sphi 0, %s91
      %s93 = sphi 0, %s91
      %s94 = sphi 0, %s93
      %s108 = sphi 0, %s94
      %s112 = sphi 0, %s112
      %s114 = sphi 0, %s112
      %s115 = sphi 0, %s114
      %s129 = sphi 0, %s115
      %s133 = sphi 0, %s133
      %s135 = sphi 0, %s133
      %s136 = sphi 0, %s135
      %s150 = sphi 0, %s136
      %s156 = sphi 0, %s158
      %s159 = sphi 0, %s156
      %s160 = sphi 0, %s159
      %s176 = sphi 0, %s160
    $region4: #{tpu_custom_call.1} parent=1 // loop_header_branch
      %18 = sbr.rel (%p16) target = $region8
    $region5: #{tpu_custom_call.1} parent=1 // loop_body
      %s20 = ssub.s32 %s15, 1
      %s21 = ssub.s32 %s15, 2
      %s22 = sadd.s32 %s15, 1
      %s23 = ssub.s32 %s15, %s22
      %p24 = scmp.eq.s32.totalorder %s23, 0
      %s26 = sadd.s32 %s25, 1
      %s27 = scalar_select %p24, %s25, %s26
      %p30 = pneg %p24
      %p31 = scmp.eq.s32.totalorder %s15, 1
      %p32 = por %p30, %p31
      %p33 = scmp.ne.s32.totalorder %s25, %s28
      %p34 = scmp.eq.s32.totalorder %s15, 0
      %p35 = por %p33, %p34
      %p36 = scmp.ne.s32.totalorder %s25, %s28
      %p37 = scmp.eq.s32.totalorder %s20, 1
      %p38 = por %p36, %p37
      %p39 = scmp.ne.s32.totalorder %s28, %s29
      %p40 = scmp.eq.s32.totalorder %s20, 0
      %p41 = por %p39, %p40
      %p42 = scmp.ne.s32.totalorder %s28, %s29
      %p43 = scmp.eq.s32.totalorder %s21, 1
      %p44 = por %p42, %p43
      %p46 = scmp.ne.s32.totalorder %s29, %s45
      %p47 = scmp.eq.s32.totalorder %s21, 0
      %p48 = por %p46, %p47
      %s50 = sadd.s32 %s49, 1
      %p53 = scmp.eq.s32.totalorder %s15, 1
      %p54 = scmp.ne.s32.totalorder %s49, %s51
      %p55 = scmp.eq.s32.totalorder %s15, 0
      %p56 = por %p54, %p55
      %p57 = scmp.ne.s32.totalorder %s49, %s51
      %p58 = scmp.eq.s32.totalorder %s20, 1
      %p59 = por %p57, %p58
      %p60 = scmp.ne.s32.totalorder %s51, %s52
      %p61 = scmp.eq.s32.totalorder %s20, 0
      %p62 = por %p60, %p61
      %p63 = scmp.ne.s32.totalorder %s51, %s52
      %p64 = scmp.eq.s32.totalorder %s21, 1
      %p65 = por %p63, %p64
      %p67 = scmp.ne.s32.totalorder %s52, %s66
      %p68 = scmp.eq.s32.totalorder %s21, 0
      %p69 = por %p67, %p68
      %s71 = sadd.s32 %s70, 1
      %p74 = scmp.eq.s32.totalorder %s15, 1
      %p75 = scmp.ne.s32.totalorder %s70, %s72
      %p76 = scmp.eq.s32.totalorder %s15, 0
      %p77 = por %p75, %p76
      %p78 = scmp.ne.s32.totalorder %s70, %s72
      %p79 = scmp.eq.s32.totalorder %s20, 1
      %p80 = por %p78, %p79
      %p81 = scmp.ne.s32.totalorder %s72, %s73
      %p82 = scmp.eq.s32.totalorder %s20, 0
      %p83 = por %p81, %p82
      %p84 = scmp.ne.s32.totalorder %s72, %s73
      %p85 = scmp.eq.s32.totalorder %s21, 1
      %p86 = por %p84, %p85
      %p88 = scmp.ne.s32.totalorder %s73, %s87
      %p89 = scmp.eq.s32.totalorder %s21, 0
      %p90 = por %p88, %p89
      %s92 = sadd.s32 %s91, 1
      %p95 = scmp.eq.s32.totalorder %s15, 1
      %p96 = scmp.ne.s32.totalorder %s91, %s93
      %p97 = scmp.eq.s32.totalorder %s15, 0
      %p98 = por %p96, %p97
      %p99 = scmp.ne.s32.totalorder %s91, %s93
      %p100 = scmp.eq.s32.totalorder %s20, 1
      %p101 = por %p99, %p100
      %p102 = scmp.ne.s32.totalorder %s93, %s94
      %p103 = scmp.eq.s32.totalorder %s20, 0
      %p104 = por %p102, %p103
      %p105 = scmp.ne.s32.totalorder %s93, %s94
      %p106 = scmp.eq.s32.totalorder %s21, 1
      %p107 = por %p105, %p106
      %p109 = scmp.ne.s32.totalorder %s94, %s108
      %p110 = scmp.eq.s32.totalorder %s21, 0
      %p111 = por %p109, %p110
      %s113 = sadd.s32 %s112, 1
      %p116 = scmp.eq.s32.totalorder %s15, 1
      %p117 = scmp.ne.s32.totalorder %s112, %s114
      %p118 = scmp.eq.s32.totalorder %s15, 0
      %p119 = por %p117, %p118
      %p120 = scmp.ne.s32.totalorder %s112, %s114
      %p121 = scmp.eq.s32.totalorder %s20, 1
      %p122 = por %p120, %p121
      %p123 = scmp.ne.s32.totalorder %s114, %s115
      %p124 = scmp.eq.s32.totalorder %s20, 0
      %p125 = por %p123, %p124
      %p126 = scmp.ne.s32.totalorder %s114, %s115
      %p127 = scmp.eq.s32.totalorder %s21, 1
      %p128 = por %p126, %p127
      %p130 = scmp.ne.s32.totalorder %s115, %s129
      %p131 = scmp.eq.s32.totalorder %s21, 0
      %p132 = por %p130, %p131
      %s134 = sadd.s32 %s133, 1
      %p137 = scmp.eq.s32.totalorder %s15, 1
      %p138 = scmp.ne.s32.totalorder %s133, %s135
      %p139 = scmp.eq.s32.totalorder %s15, 0
      %p140 = por %p138, %p139
      %p141 = scmp.ne.s32.totalorder %s133, %s135
      %p142 = scmp.eq.s32.totalorder %s20, 1
      %p143 = por %p141, %p142
      %p144 = scmp.ne.s32.totalorder %s135, %s136
      %p145 = scmp.eq.s32.totalorder %s20, 0
      %p146 = por %p144, %p145
      %p147 = scmp.ne.s32.totalorder %s135, %s136
      %p148 = scmp.eq.s32.totalorder %s21, 1
      %p149 = por %p147, %p148
      %p151 = scmp.ne.s32.totalorder %s136, %s150
      %p152 = scmp.eq.s32.totalorder %s21, 0
      %p153 = por %p151, %p152
      %s154 = ssub.s32 %s15, %s22
      %p155 = scmp.eq.s32.totalorder %s154, 0
      %s157 = sadd.s32 %s156, 1
      %s158 = scalar_select %p155, %s156, %s157
      %p161 = pneg %p155
      %p162 = scmp.eq.s32.totalorder %s15, 1
      %p163 = por %p161, %p162
      %p164 = scmp.ne.s32.totalorder %s156, %s159
      %p165 = scmp.eq.s32.totalorder %s15, 0
      %p166 = por %p164, %p165
      %p167 = scmp.ne.s32.totalorder %s156, %s159
      %p168 = scmp.eq.s32.totalorder %s20, 1
      %p169 = por %p167, %p168
      %p170 = scmp.ne.s32.totalorder %s159, %s160
      %p171 = scmp.eq.s32.totalorder %s20, 0
      %p172 = por %p170, %p171
      %p173 = scmp.ne.s32.totalorder %s159, %s160
      %p174 = scmp.eq.s32.totalorder %s21, 1
      %p175 = por %p173, %p174
      %p177 = scmp.ne.s32.totalorder %s160, %s176
      %p178 = scmp.eq.s32.totalorder %s21, 0
      %p179 = por %p177, %p178
      %p180 = scmp.le.s32.totalorder 1, %s15
      %p181 = scmp.lt.s32.totalorder %s15, 3
      %p182 = pnand %p180, %p181
      %p183 = pneg %p182
      // Predicated region
      $region9: #{tpu_custom_call.1} parent=5 // pred_check
        _
      $region10: #{tpu_custom_call.1} parent=5 // pred_check_branch
        %185 = sbr.rel (%p182) target = $region12
      $region11: #{tpu_custom_call.1} parent=5 // pred_region
        %s186 = ssub.s32 %s15, 1
        // Predicated region
        $region13: #{tpu_custom_call.1} parent=11 // pred_check
          %p187 = pneg %p62
        $region14: #{tpu_custom_call.1} parent=11 // pred_check_branch
          %189 = sbr.rel (%p187) target = $region16
        $region15: #{tpu_custom_call.1} parent=11 // pred_region
          _
        $region16: #{tpu_custom_call.1} parent=11 // pred_fallthru
          _
        // Predicated region
        $region17: #{tpu_custom_call.1} parent=11 // pred_check
          %p190 = pneg %p83
        $region18: #{tpu_custom_call.1} parent=11 // pred_check_branch
          %192 = sbr.rel (%p190) target = $region20
        $region19: #{tpu_custom_call.1} parent=11 // pred_region
          _
        $region20: #{tpu_custom_call.1} parent=11 // pred_fallthru
          _
        // Predicated region
        $region21: #{tpu_custom_call.1} parent=11 // pred_check
          %p193 = pneg %p104
        $region22: #{tpu_custom_call.1} parent=11 // pred_check_branch
          %195 = sbr.rel (%p193) target = $region24
        $region23: #{tpu_custom_call.1} parent=11 // pred_region
          _
        $region24: #{tpu_custom_call.1} parent=11 // pred_fallthru
          _
        // Predicated region
        $region25: #{tpu_custom_call.1} parent=11 // pred_check
          %p196 = pneg %p125
        $region26: #{tpu_custom_call.1} parent=11 // pred_check_branch
          %198 = sbr.rel (%p196) target = $region28
        $region27: #{tpu_custom_call.1} parent=11 // pred_region
          _
        $region28: #{tpu_custom_call.1} parent=11 // pred_fallthru
          _
        // Predicated region
        $region29: #{tpu_custom_call.1} parent=11 // pred_check
          %p199 = pneg %p146
        $region30: #{tpu_custom_call.1} parent=11 // pred_check_branch
          %201 = sbr.rel (%p199) target = $region32
        $region31: #{tpu_custom_call.1} parent=11 // pred_region
          _
        $region32: #{tpu_custom_call.1} parent=11 // pred_fallthru
          _
      $region12: #{tpu_custom_call.1} parent=5 // pred_fallthru
        _
      %p202 = scmp.lt.s32.totalorder %s15, 2
      // Predicated region
      $region33: #{tpu_custom_call.1} parent=5 // pred_check
        %p203 = pneg %p202
      $region34: #{tpu_custom_call.1} parent=5 // pred_check_branch
        %205 = sbr.rel (%p203) target = $region36
      $region35: #{tpu_custom_call.1} parent=5 // pred_region
        // Predicated region
        $region37: #{tpu_custom_call.1} parent=35 // pred_check
          %p206 = pneg %p35
        $region38: #{tpu_custom_call.1} parent=35 // pred_check_branch
          %208 = sbr.rel (%p206) target = $region40
        $region39: #{tpu_custom_call.1} parent=35 // pred_region
          %p209 = scmp.lt.s32.totalorder %s15, 1
          %s210 = scalar_select %p209, %s15, 1
          %s211 = smul.addr %s210, 2
          %s212 = smul.addr %s211, 4
          %s213 = scalar_lea.vmem %s0, %s212
        $region40: #{tpu_custom_call.1} parent=35 // pred_fallthru
          _
      $region36: #{tpu_custom_call.1} parent=5 // pred_fallthru
        _
      %p214 = scmp.le.s32.totalorder 1, %s15
      %p215 = scmp.lt.s32.totalorder %s15, 3
      %p216 = pnand %p214, %p215
      %p217 = pneg %p216
      // Predicated region
      $region41: #{tpu_custom_call.1} parent=5 // pred_check
        _
      $region42: #{tpu_custom_call.1} parent=5 // pred_check_branch
        %219 = sbr.rel (%p216) target = $region44
      $region43: #{tpu_custom_call.1} parent=5 // pred_region
        %s220 = ssub.s32 %s15, 1
        %p221 = scmp.lt.s32.totalorder %s20, 1
        %s222 = scalar_select %p221, %s20, 1
        %s223 = smul.addr %s222, 2
        %s224 = smul.addr %s223, 4
        %s225 = scalar_lea.vmem %s0, %s224
        %p226 = pneg %p41
        %p227 = pneg %p38
        %p228 = pneg %p62
        %p229 = pneg %p59
        %p230 = pneg %p83
        %p231 = pneg %p80
        %p232 = pneg %p104
        %p233 = pneg %p101
        %p234 = pneg %p125
        %p235 = pneg %p122
        %p236 = pneg %p146
        %p237 = pneg %p143
        %p238 = pneg %p172
        %p239 = pneg %p169
        %s240 = sand.u32 %s159, 1
        %s241 = scalar_lea.sflag [#allocation4], %s240
        %s242 = sand.u32 %s159, 1
        %s243 = smul.addr %s242, 8
        %s244 = scalar_lea.vmem [#allocation3], %s243
        %p245 = scmp.lt.s32.totalorder %s20, 1
        %s246 = scalar_select %p245, %s20, 1
        %s247 = smul.addr %s246, 2
        %s248 = smul.addr %s247, 4
        %s249 = scalar_lea.vmem %s0, %s248
        %v250 = vld [vmem:[%s249] sm:$0xff]
        %251 = vst [vmem:[#allocation2] sm:$0xff] 0.0
        %vm252 = vcmask 273408
        %253 = vst.msk [vmem:[#allocation2 + $0x8] sm:$0xf] %vm252, 0.0
        %255 = vrot.lane.b32.xlu0 %v250, 17
        %v256 = vpop.permute.xlu0 %255
        %v257 = vrot.slane %v256, 4
        %vm258 = vcmask 138240
        %v259 = vsel %vm258, %v257, %v256
        %vm262 = vcmask 1043592
        %vm263 = vcmask 1047556
        %vm264 = vmor %vm263, %vm262
        %265 = vst.msk [vmem:[#allocation2] sm:$0xff] %vm264, %v259
        %vm266 = vcmask 134144
        %267 = vst.msk [vmem:[#allocation2 + $0x8] sm:$0xf] %vm266, %v257
        %v268 = vld [vmem:[#allocation2] sm:$0xff]
        %v269 = vld [vmem:[%s1] sm:$0x3]
        %v271 = vlaneseq
        %v272 = vshrl.u32 %v271, 7
        %v273 = vsub.s32 0, %v272
        %v274 = vrot.slane %v269, %v273
        %v275 = vlaneseq
        %v276 = vshrl.u32 %v275, 7
        %v277 = vsub.s32 1, %v276
        %v278 = vrot.slane %v269, %v277
        %v279 = vcombine.low %v274, %v278
        %v281 = vmul.f32 %v268, %v279
        %v282 = vld [vmem:[%s2] sm:$0xf]
        %v283 = vld [vmem:[#allocation2 + $0x8] sm:$0xf]
        %s284 = scalar_lea.vmem %s1, 2
        %v285 = vld [vmem:[%s284] sm:$0x3]
        %v287 = vlaneseq
        %v288 = vshrl.u32 %v287, 7
        %v289 = vsub.s32 0, %v288
        %v290 = vrot.slane %v285, %v289
        %v291 = vlaneseq
        %v292 = vshrl.u32 %v291, 7
        %v293 = vsub.s32 1, %v292
        %v294 = vrot.slane %v285, %v293
        %v295 = vcombine.low %v290, %v294
        %296 = vrot.lane.b32.xlu0 %v295, 1
        %v297 = vpop.permute.xlu0 %296
        %v298 = vrot.slane %v297, 4
        %vm299 = vcmask 7168
        %v300 = vsel %vm299, %v298, %v297
        %v303 = vmul.f32 %v268, %v300
        %v304 = vmul.f32 %v283, %v298
        %s305 = scalar_lea.vmem %s2, 4
        %v306 = vld [vmem:[%s305] sm:$0xf]
        %v309 = vcombine.high %v303, %v303
        %310 = vrot.lane.b32.xlu0 %v303, 127
        %v311 = vpop.permute.xlu0 %310
        %312 = vrot.lane.b32.xlu0 %v309, 127
        %v313 = vpop.permute.xlu0 %312
        %314 = vrot.lane.b32.xlu0 %v304, 127
        %v315 = vpop.permute.xlu0 %314
        %vm316 = vcmask 1039360
        %v317 = vsel %vm316, %v311, %v313
        %v318 = vsel %vm316, %v313, %v315
        %vm319 = vcmask 31744
        %v321 = vsel %vm319, %v306, 0
        %vm323 = vcmask 1043456
        %v324 = vsel %vm323, %v317, 0
        %v326 = vsel %vm323, %v318, 0
        %328 = vmatprep.subr.mxu0 0.0
        %329 = vmatpush1.msra.mxu0 0.0
        %330 = vmatprep.subr.mxu0 0.0
        %331 = vmatpush1.msra.mxu0 0.0
        %332 = vmatprep.subr.mxu0 0.0
        %333 = vmatpush1.msra.mxu0 0.0
        %334 = vmatprep.subr.mxu0 0.0
        %335 = vmatpush1.msra.mxu0 0.0
        %336 = vmatprep.subr.mxu0 0.0
        %337 = vmatpush1.msra.mxu0 0.0
        %338 = vmatprep.subr.mxu0 0.0
        %339 = vmatpush1.msra.mxu0 0.0
        %340 = vmatprep.subr.mxu0 0.0
        %341 = vmatpush1.msra.mxu0 0.0
        %342 = vmatprep.subr.mxu0 0.0
        %343 = vmatpush1.msra.mxu0 0.0
        %344 = vmatprep.subr.mxu0 0.0
        %345 = vmatpush1.msra.mxu0 0.0
        %346 = vmatprep.subr.mxu0 0.0
        %347 = vmatpush1.msra.mxu0 0.0
        %348 = vmatprep.subr.mxu0 0.0
        %349 = vmatpush1.msra.mxu0 0.0
        %350 = vmatprep.subr.mxu0 0.0
        %351 = vmatpush1.msra.mxu0 0.0
        %352 = vmatprep.subr.mxu0 0.0
        %353 = vmatpush1.msra.mxu0 0.0
        %354 = vmatprep.subr.mxu0 0.0
        %355 = vmatpush1.msra.mxu0 0.0
        %356 = vmatprep.subr.mxu0 0.0
        %357 = vmatpush1.msra.mxu0 0.0
        %358 = vmatprep.subr.mxu0 %v326
        %359 = vmatpush1.msra.mxu0 %v324
        %360 = vmatprep.subr.mxu0 0.0
        %361 = vmatpush2.msra.mxu0 0.0
        %362 = vmatprep.subr.mxu0 0.0
        %363 = vmatpush2.msra.mxu0 0.0
        %364 = vmatprep.subr.mxu0 0.0
        %365 = vmatpush2.msra.mxu0 0.0
        %366 = vmatprep.subr.mxu0 0.0
        %367 = vmatpush2.msra.mxu0 0.0
        %368 = vmatprep.subr.mxu0 0.0
        %369 = vmatpush2.msra.mxu0 0.0
        %370 = vmatprep.subr.mxu0 0.0
        %371 = vmatpush2.msra.mxu0 0.0
        %372 = vmatprep.subr.mxu0 0.0
        %373 = vmatpush2.msra.mxu0 0.0
        %374 = vmatprep.subr.mxu0 0.0
        %375 = vmatpush2.msra.mxu0 0.0
        %376 = vmatprep.subr.mxu0 0.0
        %377 = vmatpush2.msra.mxu0 0.0
        %378 = vmatprep.subr.mxu0 0.0
        %379 = vmatpush2.msra.mxu0 0.0
        %380 = vmatprep.subr.mxu0 0.0
        %381 = vmatpush2.msra.mxu0 0.0
        %382 = vmatprep.subr.mxu0 0.0
        %383 = vmatpush2.msra.mxu0 0.0
        %384 = vmatprep.subr.mxu0 0.0
        %385 = vmatpush2.msra.mxu0 0.0
        %386 = vmatprep.subr.mxu0 0.0
        %387 = vmatpush2.msra.mxu0 0.0
        %388 = vmatprep.subr.mxu0 0.0
        %389 = vmatpush2.msra.mxu0 0.0
        %390 = vmatprep.subr.mxu0 0.0
        %391 = vmatpush2.msra.mxu0 0.0
        %392 = vmatprep.mubr.f32.mxu0 0.0
        %393 = vmatmul.mubr.f32.gmra.mxu0 %v321
        %v394 = vpop.f32.mrf.mxu0
        %v395 = vadd.f32 0.0, %v394
        %v396 = vpop.f32.mrf.mxu0
        %v397 = vadd.f32 0.0, %v396
        %398 = vdwg.mxu0
        %v400 = vcombine.high %v281, %v281
        %v402 = vsel %vm319, %v282, 0
        %v404 = vsel %vm323, %v281, 0
        %v406 = vsel %vm323, %v400, 0
        %408 = vmatprep.subr.mxu0 0.0
        %409 = vmatpush1.msra.mxu0 0.0
        %410 = vmatprep.subr.mxu0 0.0
        %411 = vmatpush1.msra.mxu0 0.0
        %412 = vmatprep.subr.mxu0 0.0
        %413 = vmatpush1.msra.mxu0 0.0
        %414 = vmatprep.subr.mxu0 0.0
        %415 = vmatpush1.msra.mxu0 0.0
        %416 = vmatprep.subr.mxu0 0.0
        %417 = vmatpush1.msra.mxu0 0.0
        %418 = vmatprep.subr.mxu0 0.0
        %419 = vmatpush1.msra.mxu0 0.0
        %420 = vmatprep.subr.mxu0 0.0
        %421 = vmatpush1.msra.mxu0 0.0
        %422 = vmatprep.subr.mxu0 0.0
        %423 = vmatpush1.msra.mxu0 0.0
        %424 = vmatprep.subr.mxu0 0.0
        %425 = vmatpush1.msra.mxu0 0.0
        %426 = vmatprep.subr.mxu0 0.0
        %427 = vmatpush1.msra.mxu0 0.0
        %428 = vmatprep.subr.mxu0 0.0
        %429 = vmatpush1.msra.mxu0 0.0
        %430 = vmatprep.subr.mxu0 0.0
        %431 = vmatpush1.msra.mxu0 0.0
        %432 = vmatprep.subr.mxu0 0.0
        %433 = vmatpush1.msra.mxu0 0.0
        %434 = vmatprep.subr.mxu0 0.0
        %435 = vmatpush1.msra.mxu0 0.0
        %436 = vmatprep.subr.mxu0 0.0
        %437 = vmatpush1.msra.mxu0 0.0
        %438 = vmatprep.subr.mxu0 %v406
        %439 = vmatpush1.msra.mxu0 %v404
        %440 = vmatprep.subr.mxu0 0.0
        %441 = vmatpush2.msra.mxu0 0.0
        %442 = vmatprep.subr.mxu0 0.0
        %443 = vmatpush2.msra.mxu0 0.0
        %444 = vmatprep.subr.mxu0 0.0
        %445 = vmatpush2.msra.mxu0 0.0
        %446 = vmatprep.subr.mxu0 0.0
        %447 = vmatpush2.msra.mxu0 0.0
        %448 = vmatprep.subr.mxu0 0.0
        %449 = vmatpush2.msra.mxu0 0.0
        %450 = vmatprep.subr.mxu0 0.0
        %451 = vmatpush2.msra.mxu0 0.0
        %452 = vmatprep.subr.mxu0 0.0
        %453 = vmatpush2.msra.mxu0 0.0
        %454 = vmatprep.subr.mxu0 0.0
        %455 = vmatpush2.msra.mxu0 0.0
        %456 = vmatprep.subr.mxu0 0.0
        %457 = vmatpush2.msra.mxu0 0.0
        %458 = vmatprep.subr.mxu0 0.0
        %459 = vmatpush2.msra.mxu0 0.0
        %460 = vmatprep.subr.mxu0 0.0
        %461 = vmatpush2.msra.mxu0 0.0
        %462 = vmatprep.subr.mxu0 0.0
        %463 = vmatpush2.msra.mxu0 0.0
        %464 = vmatprep.subr.mxu0 0.0
        %465 = vmatpush2.msra.mxu0 0.0
        %466 = vmatprep.subr.mxu0 0.0
        %467 = vmatpush2.msra.mxu0 0.0
        %468 = vmatprep.subr.mxu0 0.0
        %469 = vmatpush2.msra.mxu0 0.0
        %470 = vmatprep.subr.mxu0 0.0
        %471 = vmatpush2.msra.mxu0 0.0
        %472 = vmatprep.mubr.f32.mxu0 0.0
        %473 = vmatmul.mubr.f32.gmra.mxu0 %v402
        %v474 = vpop.f32.mrf.mxu0
        %v475 = vadd.f32 %v395, %v474
        %v476 = vpop.f32.mrf.mxu0
        %v477 = vadd.f32 %v397, %v476
        %478 = vdwg.mxu0
        %v479 = vld [vmem:[#allocation2] sm:$0xff]
        %v480 = vld [vmem:[#allocation2 + $0x8] sm:$0xf]
        %s481 = scalar_lea.vmem %s1, 4
        %v482 = vld [vmem:[%s481] sm:$0x3]
        %v484 = vlaneseq
        %v485 = vshrl.u32 %v484, 7
        %v486 = vsub.s32 0, %v485
        %v487 = vrot.slane %v482, %v486
        %v488 = vlaneseq
        %v489 = vshrl.u32 %v488, 7
        %v490 = vsub.s32 1, %v489
        %v491 = vrot.slane %v482, %v490
        %v492 = vcombine.low %v487, %v491
        %493 = vrot.lane.b32.xlu0 %v492, 2
        %v494 = vpop.permute.xlu0 %493
        %v495 = vrot.slane %v494, 4
        %vm496 = vcmask 15360
        %v497 = vsel %vm496, %v495, %v494
        %v500 = vmul.f32 %v479, %v497
        %v501 = vmul.f32 %v480, %v495
        %s502 = scalar_lea.vmem %s2, 8
        %v503 = vld [vmem:[%s502] sm:$0xf]
        %v506 = vcombine.high %v500, %v500
        %507 = vrot.lane.b32.xlu0 %v500, 126
        %v508 = vpop.permute.xlu0 %507
        %509 = vrot.lane.b32.xlu0 %v506, 126
        %v510 = vpop.permute.xlu0 %509
        %511 = vrot.lane.b32.xlu0 %v501, 126
        %v512 = vpop.permute.xlu0 %511
        %vm513 = vcmask 1031168
        %v514 = vsel %vm513, %v508, %v510
        %v515 = vsel %vm513, %v510, %v512
        %v517 = vsel %vm319, %v503, 0
        %v519 = vsel %vm323, %v514, 0
        %v521 = vsel %vm323, %v515, 0
        %523 = vmatprep.subr.mxu0 0.0
        %524 = vmatpush1.msra.mxu0 0.0
        %525 = vmatprep.subr.mxu0 0.0
        %526 = vmatpush1.msra.mxu0 0.0
        %527 = vmatprep.subr.mxu0 0.0
        %528 = vmatpush1.msra.mxu0 0.0
        %529 = vmatprep.subr.mxu0 0.0
        %530 = vmatpush1.msra.mxu0 0.0
        %531 = vmatprep.subr.mxu0 0.0
        %532 = vmatpush1.msra.mxu0 0.0
        %533 = vmatprep.subr.mxu0 0.0
        %534 = vmatpush1.msra.mxu0 0.0
        %535 = vmatprep.subr.mxu0 0.0
        %536 = vmatpush1.msra.mxu0 0.0
        %537 = vmatprep.subr.mxu0 0.0
        %538 = vmatpush1.msra.mxu0 0.0
        %539 = vmatprep.subr.mxu0 0.0
        %540 = vmatpush1.msra.mxu0 0.0
        %541 = vmatprep.subr.mxu0 0.0
        %542 = vmatpush1.msra.mxu0 0.0
        %543 = vmatprep.subr.mxu0 0.0
        %544 = vmatpush1.msra.mxu0 0.0
        %545 = vmatprep.subr.mxu0 0.0
        %546 = vmatpush1.msra.mxu0 0.0
        %547 = vmatprep.subr.mxu0 0.0
        %548 = vmatpush1.msra.mxu0 0.0
        %549 = vmatprep.subr.mxu0 0.0
        %550 = vmatpush1.msra.mxu0 0.0
        %551 = vmatprep.subr.mxu0 0.0
        %552 = vmatpush1.msra.mxu0 0.0
        %553 = vmatprep.subr.mxu0 %v521
        %554 = vmatpush1.msra.mxu0 %v519
        %555 = vmatprep.subr.mxu0 0.0
        %556 = vmatpush2.msra.mxu0 0.0
        %557 = vmatprep.subr.mxu0 0.0
        %558 = vmatpush2.msra.mxu0 0.0
        %559 = vmatprep.subr.mxu0 0.0
        %560 = vmatpush2.msra.mxu0 0.0
        %561 = vmatprep.subr.mxu0 0.0
        %562 = vmatpush2.msra.mxu0 0.0
        %563 = vmatprep.subr.mxu0 0.0
        %564 = vmatpush2.msra.mxu0 0.0
        %565 = vmatprep.subr.mxu0 0.0
        %566 = vmatpush2.msra.mxu0 0.0
        %567 = vmatprep.subr.mxu0 0.0
        %568 = vmatpush2.msra.mxu0 0.0
        %569 = vmatprep.subr.mxu0 0.0
        %570 = vmatpush2.msra.mxu0 0.0
        %571 = vmatprep.subr.mxu0 0.0
        %572 = vmatpush2.msra.mxu0 0.0
        %573 = vmatprep.subr.mxu0 0.0
        %574 = vmatpush2.msra.mxu0 0.0
        %575 = vmatprep.subr.mxu0 0.0
        %576 = vmatpush2.msra.mxu0 0.0
        %577 = vmatprep.subr.mxu0 0.0
        %578 = vmatpush2.msra.mxu0 0.0
        %579 = vmatprep.subr.mxu0 0.0
        %580 = vmatpush2.msra.mxu0 0.0
        %581 = vmatprep.subr.mxu0 0.0
        %582 = vmatpush2.msra.mxu0 0.0
        %583 = vmatprep.subr.mxu0 0.0
        %584 = vmatpush2.msra.mxu0 0.0
        %585 = vmatprep.subr.mxu0 0.0
        %586 = vmatpush2.msra.mxu0 0.0
        %587 = vmatprep.mubr.f32.mxu0 0.0
        %588 = vmatmul.mubr.f32.gmra.mxu0 %v517
        %v589 = vpop.f32.mrf.mxu0
        %v590 = vadd.f32 0.0, %v589
        %v591 = vpop.f32.mrf.mxu0
        %v592 = vadd.f32 0.0, %v591
        %593 = vdwg.mxu0
        %v594 = vadd.f32 %v475, %v590
        %v595 = vadd.f32 %v477, %v592
        %v596 = vld [vmem:[#allocation2] sm:$0xff]
        %v597 = vld [vmem:[#allocation2 + $0x8] sm:$0xf]
        %s598 = scalar_lea.vmem %s1, 6
        %v599 = vld [vmem:[%s598] sm:$0x3]
        %v601 = vlaneseq
        %v602 = vshrl.u32 %v601, 7
        %v603 = vsub.s32 0, %v602
        %v604 = vrot.slane %v599, %v603
        %v605 = vlaneseq
        %v606 = vshrl.u32 %v605, 7
        %v607 = vsub.s32 1, %v606
        %v608 = vrot.slane %v599, %v607
        %v609 = vcombine.low %v604, %v608
        %610 = vrot.lane.b32.xlu0 %v609, 16
        %v611 = vpop.permute.xlu0 %610
        %v612 = vrot.slane %v611, 4
        %vm613 = vcmask 130048
        %v614 = vsel %vm613, %v612, %v611
        %v617 = vmul.f32 %v596, %v614
        %v618 = vmul.f32 %v597, %v612
        %s619 = scalar_lea.vmem %s2, 12
        %v620 = vld [vmem:[%s619] sm:$0xf]
        %v623 = vcombine.high %v617, %v617
        %624 = vrot.lane.b32.xlu0 %v617, 112
        %v625 = vpop.permute.xlu0 %624
        %626 = vrot.lane.b32.xlu0 %v623, 112
        %v627 = vpop.permute.xlu0 %626
        %628 = vrot.lane.b32.xlu0 %v618, 112
        %v629 = vpop.permute.xlu0 %628
        %vm630 = vcmask 916480
        %v631 = vsel %vm630, %v625, %v627
        %v632 = vsel %vm630, %v627, %v629
        %v634 = vsel %vm319, %v620, 0
        %v636 = vsel %vm323, %v631, 0
        %v638 = vsel %vm323, %v632, 0
        %640 = vmatprep.subr.mxu0 0.0
        %641 = vmatpush1.msra.mxu0 0.0
        %642 = vmatprep.subr.mxu0 0.0
        %643 = vmatpush1.msra.mxu0 0.0
        %644 = vmatprep.subr.mxu0 0.0
        %645 = vmatpush1.msra.mxu0 0.0
        %646 = vmatprep.subr.mxu0 0.0
        %647 = vmatpush1.msra.mxu0 0.0
        %648 = vmatprep.subr.mxu0 0.0
        %649 = vmatpush1.msra.mxu0 0.0
        %650 = vmatprep.subr.mxu0 0.0
        %651 = vmatpush1.msra.mxu0 0.0
        %652 = vmatprep.subr.mxu0 0.0
        %653 = vmatpush1.msra.mxu0 0.0
        %654 = vmatprep.subr.mxu0 0.0
        %655 = vmatpush1.msra.mxu0 0.0
        %656 = vmatprep.subr.mxu0 0.0
        %657 = vmatpush1.msra.mxu0 0.0
        %658 = vmatprep.subr.mxu0 0.0
        %659 = vmatpush1.msra.mxu0 0.0
        %660 = vmatprep.subr.mxu0 0.0
        %661 = vmatpush1.msra.mxu0 0.0
        %662 = vmatprep.subr.mxu0 0.0
        %663 = vmatpush1.msra.mxu0 0.0
        %664 = vmatprep.subr.mxu0 0.0
        %665 = vmatpush1.msra.mxu0 0.0
        %666 = vmatprep.subr.mxu0 0.0
        %667 = vmatpush1.msra.mxu0 0.0
        %668 = vmatprep.subr.mxu0 0.0
        %669 = vmatpush1.msra.mxu0 0.0
        %670 = vmatprep.subr.mxu0 %v638
        %671 = vmatpush1.msra.mxu0 %v636
        %672 = vmatprep.subr.mxu0 0.0
        %673 = vmatpush2.msra.mxu0 0.0
        %674 = vmatprep.subr.mxu0 0.0
        %675 = vmatpush2.msra.mxu0 0.0
        %676 = vmatprep.subr.mxu0 0.0
        %677 = vmatpush2.msra.mxu0 0.0
        %678 = vmatprep.subr.mxu0 0.0
        %679 = vmatpush2.msra.mxu0 0.0
        %680 = vmatprep.subr.mxu0 0.0
        %681 = vmatpush2.msra.mxu0 0.0
        %682 = vmatprep.subr.mxu0 0.0
        %683 = vmatpush2.msra.mxu0 0.0
        %684 = vmatprep.subr.mxu0 0.0
        %685 = vmatpush2.msra.mxu0 0.0
        %686 = vmatprep.subr.mxu0 0.0
        %687 = vmatpush2.msra.mxu0 0.0
        %688 = vmatprep.subr.mxu0 0.0
        %689 = vmatpush2.msra.mxu0 0.0
        %690 = vmatprep.subr.mxu0 0.0
        %691 = vmatpush2.msra.mxu0 0.0
        %692 = vmatprep.subr.mxu0 0.0
        %693 = vmatpush2.msra.mxu0 0.0
        %694 = vmatprep.subr.mxu0 0.0
        %695 = vmatpush2.msra.mxu0 0.0
        %696 = vmatprep.subr.mxu0 0.0
        %697 = vmatpush2.msra.mxu0 0.0
        %698 = vmatprep.subr.mxu0 0.0
        %699 = vmatpush2.msra.mxu0 0.0
        %700 = vmatprep.subr.mxu0 0.0
        %701 = vmatpush2.msra.mxu0 0.0
        %702 = vmatprep.subr.mxu0 0.0
        %703 = vmatpush2.msra.mxu0 0.0
        %704 = vmatprep.mubr.f32.mxu0 0.0
        %705 = vmatmul.mubr.f32.gmra.mxu0 %v634
        %v706 = vpop.f32.mrf.mxu0
        %v707 = vadd.f32 0.0, %v706
        %v708 = vpop.f32.mrf.mxu0
        %v709 = vadd.f32 0.0, %v708
        %710 = vdwg.mxu0
        %v711 = vadd.f32 %v594, %v707
        %v712 = vadd.f32 %v595, %v709
        %v713 = vld [vmem:[#allocation2] sm:$0xff]
        %v714 = vld [vmem:[#allocation2 + $0x8] sm:$0xf]
        %s715 = scalar_lea.vmem %s1, 8
        %v716 = vld [vmem:[%s715] sm:$0x3]
        %v718 = vlaneseq
        %v719 = vshrl.u32 %v718, 7
        %v720 = vsub.s32 0, %v719
        %v721 = vrot.slane %v716, %v720
        %v722 = vlaneseq
        %v723 = vshrl.u32 %v722, 7
        %v724 = vsub.s32 1, %v723
        %v725 = vrot.slane %v716, %v724
        %v726 = vcombine.low %v721, %v725
        %727 = vrot.lane.b32.xlu0 %v726, 17
        %v728 = vpop.permute.xlu0 %727
        %v729 = vrot.slane %v728, 4
        %v730 = vsel %vm258, %v729, %v728
        %v733 = vmul.f32 %v713, %v730
        %v734 = vmul.f32 %v714, %v729
        %s735 = scalar_lea.vmem %s2, 16
        %v736 = vld [vmem:[%s735] sm:$0xf]
        %v739 = vcombine.high %v733, %v733
        %740 = vrot.lane.b32.xlu0 %v733, 111
        %v741 = vpop.permute.xlu0 %740
        %742 = vrot.lane.b32.xlu0 %v739, 111
        %v743 = vpop.permute.xlu0 %742
        %744 = vrot.lane.b32.xlu0 %v734, 111
        %v745 = vpop.permute.xlu0 %744
        %vm746 = vcmask 908288
        %v747 = vsel %vm746, %v741, %v743
        %v748 = vsel %vm746, %v743, %v745
        %v750 = vsel %vm319, %v736, 0
        %v752 = vsel %vm323, %v747, 0
        %v754 = vsel %vm323, %v748, 0
        %756 = vmatprep.subr.mxu0 0.0
        %757 = vmatpush1.msra.mxu0 0.0
        %758 = vmatprep.subr.mxu0 0.0
        %759 = vmatpush1.msra.mxu0 0.0
        %760 = vmatprep.subr.mxu0 0.0
        %761 = vmatpush1.msra.mxu0 0.0
        %762 = vmatprep.subr.mxu0 0.0
        %763 = vmatpush1.msra.mxu0 0.0
        %764 = vmatprep.subr.mxu0 0.0
        %765 = vmatpush1.msra.mxu0 0.0
        %766 = vmatprep.subr.mxu0 0.0
        %767 = vmatpush1.msra.mxu0 0.0
        %768 = vmatprep.subr.mxu0 0.0
        %769 = vmatpush1.msra.mxu0 0.0
        %770 = vmatprep.subr.mxu0 0.0
        %771 = vmatpush1.msra.mxu0 0.0
        %772 = vmatprep.subr.mxu0 0.0
        %773 = vmatpush1.msra.mxu0 0.0
        %774 = vmatprep.subr.mxu0 0.0
        %775 = vmatpush1.msra.mxu0 0.0
        %776 = vmatprep.subr.mxu0 0.0
        %777 = vmatpush1.msra.mxu0 0.0
        %778 = vmatprep.subr.mxu0 0.0
        %779 = vmatpush1.msra.mxu0 0.0
        %780 = vmatprep.subr.mxu0 0.0
        %781 = vmatpush1.msra.mxu0 0.0
        %782 = vmatprep.subr.mxu0 0.0
        %783 = vmatpush1.msra.mxu0 0.0
        %784 = vmatprep.subr.mxu0 0.0
        %785 = vmatpush1.msra.mxu0 0.0
        %786 = vmatprep.subr.mxu0 %v754
        %787 = vmatpush1.msra.mxu0 %v752
        %788 = vmatprep.subr.mxu0 0.0
        %789 = vmatpush2.msra.mxu0 0.0
        %790 = vmatprep.subr.mxu0 0.0
        %791 = vmatpush2.msra.mxu0 0.0
        %792 = vmatprep.subr.mxu0 0.0
        %793 = vmatpush2.msra.mxu0 0.0
        %794 = vmatprep.subr.mxu0 0.0
        %795 = vmatpush2.msra.mxu0 0.0
        %796 = vmatprep.subr.mxu0 0.0
        %797 = vmatpush2.msra.mxu0 0.0
        %798 = vmatprep.subr.mxu0 0.0
        %799 = vmatpush2.msra.mxu0 0.0
        %800 = vmatprep.subr.mxu0 0.0
        %801 = vmatpush2.msra.mxu0 0.0
        %802 = vmatprep.subr.mxu0 0.0
        %803 = vmatpush2.msra.mxu0 0.0
        %804 = vmatprep.subr.mxu0 0.0
        %805 = vmatpush2.msra.mxu0 0.0
        %806 = vmatprep.subr.mxu0 0.0
        %807 = vmatpush2.msra.mxu0 0.0
        %808 = vmatprep.subr.mxu0 0.0
        %809 = vmatpush2.msra.mxu0 0.0
        %810 = vmatprep.subr.mxu0 0.0
        %811 = vmatpush2.msra.mxu0 0.0
        %812 = vmatprep.subr.mxu0 0.0
        %813 = vmatpush2.msra.mxu0 0.0
        %814 = vmatprep.subr.mxu0 0.0
        %815 = vmatpush2.msra.mxu0 0.0
        %816 = vmatprep.subr.mxu0 0.0
        %817 = vmatpush2.msra.mxu0 0.0
        %818 = vmatprep.subr.mxu0 0.0
        %819 = vmatpush2.msra.mxu0 0.0
        %820 = vmatprep.mubr.f32.mxu0 0.0
        %821 = vmatmul.mubr.f32.gmra.mxu0 %v750
        %v822 = vpop.f32.mrf.mxu0
        %v823 = vadd.f32 0.0, %v822
        %v824 = vpop.f32.mrf.mxu0
        %v825 = vadd.f32 0.0, %v824
        %826 = vdwg.mxu0
        %v827 = vadd.f32 %v711, %v823
        %v828 = vadd.f32 %v712, %v825
        %v829 = vld [vmem:[#allocation2] sm:$0xff]
        %v830 = vld [vmem:[#allocation2 + $0x8] sm:$0xf]
        %s831 = scalar_lea.vmem %s1, 10
        %v832 = vld [vmem:[%s831] sm:$0x3]
        %v834 = vlaneseq
        %v835 = vshrl.u32 %v834, 7
        %v836 = vsub.s32 0, %v835
        %v837 = vrot.slane %v832, %v836
        %v838 = vlaneseq
        %v839 = vshrl.u32 %v838, 7
        %v840 = vsub.s32 1, %v839
        %v841 = vrot.slane %v832, %v840
        %v842 = vcombine.low %v837, %v841
        %843 = vrot.lane.b32.xlu0 %v842, 18
        %v844 = vpop.permute.xlu0 %843
        %v845 = vrot.slane %v844, 4
        %vm846 = vcmask 146432
        %v847 = vsel %vm846, %v845, %v844
        %v850 = vmul.f32 %v829, %v847
        %v851 = vmul.f32 %v830, %v845
        %s852 = scalar_lea.vmem %s2, 20
        %v853 = vld [vmem:[%s852] sm:$0xf]
        %v856 = vcombine.high %v850, %v850
        %857 = vrot.lane.b32.xlu0 %v850, 110
        %v858 = vpop.permute.xlu0 %857
        %859 = vrot.lane.b32.xlu0 %v856, 110
        %v860 = vpop.permute.xlu0 %859
        %861 = vrot.lane.b32.xlu0 %v851, 110
        %v862 = vpop.permute.xlu0 %861
        %vm863 = vcmask 900096
        %v864 = vsel %vm863, %v858, %v860
        %v865 = vsel %vm863, %v860, %v862
        %v867 = vsel %vm319, %v853, 0
        %v869 = vsel %vm323, %v864, 0
        %v871 = vsel %vm323, %v865, 0
        %873 = vmatprep.subr.mxu0 0.0
        %874 = vmatpush1.msra.mxu0 0.0
        %875 = vmatprep.subr.mxu0 0.0
        %876 = vmatpush1.msra.mxu0 0.0
        %877 = vmatprep.subr.mxu0 0.0
        %878 = vmatpush1.msra.mxu0 0.0
        %879 = vmatprep.subr.mxu0 0.0
        %880 = vmatpush1.msra.mxu0 0.0
        %881 = vmatprep.subr.mxu0 0.0
        %882 = vmatpush1.msra.mxu0 0.0
        %883 = vmatprep.subr.mxu0 0.0
        %884 = vmatpush1.msra.mxu0 0.0
        %885 = vmatprep.subr.mxu0 0.0
        %886 = vmatpush1.msra.mxu0 0.0
        %887 = vmatprep.subr.mxu0 0.0
        %888 = vmatpush1.msra.mxu0 0.0
        %889 = vmatprep.subr.mxu0 0.0
        %890 = vmatpush1.msra.mxu0 0.0
        %891 = vmatprep.subr.mxu0 0.0
        %892 = vmatpush1.msra.mxu0 0.0
        %893 = vmatprep.subr.mxu0 0.0
        %894 = vmatpush1.msra.mxu0 0.0
        %895 = vmatprep.subr.mxu0 0.0
        %896 = vmatpush1.msra.mxu0 0.0
        %897 = vmatprep.subr.mxu0 0.0
        %898 = vmatpush1.msra.mxu0 0.0
        %899 = vmatprep.subr.mxu0 0.0
        %900 = vmatpush1.msra.mxu0 0.0
        %901 = vmatprep.subr.mxu0 0.0
        %902 = vmatpush1.msra.mxu0 0.0
        %903 = vmatprep.subr.mxu0 %v871
        %904 = vmatpush1.msra.mxu0 %v869
        %905 = vmatprep.subr.mxu0 0.0
        %906 = vmatpush2.msra.mxu0 0.0
        %907 = vmatprep.subr.mxu0 0.0
        %908 = vmatpush2.msra.mxu0 0.0
        %909 = vmatprep.subr.mxu0 0.0
        %910 = vmatpush2.msra.mxu0 0.0
        %911 = vmatprep.subr.mxu0 0.0
        %912 = vmatpush2.msra.mxu0 0.0
        %913 = vmatprep.subr.mxu0 0.0
        %914 = vmatpush2.msra.mxu0 0.0
        %915 = vmatprep.subr.mxu0 0.0
        %916 = vmatpush2.msra.mxu0 0.0
        %917 = vmatprep.subr.mxu0 0.0
        %918 = vmatpush2.msra.mxu0 0.0
        %919 = vmatprep.subr.mxu0 0.0
        %920 = vmatpush2.msra.mxu0 0.0
        %921 = vmatprep.subr.mxu0 0.0
        %922 = vmatpush2.msra.mxu0 0.0
        %923 = vmatprep.subr.mxu0 0.0
        %924 = vmatpush2.msra.mxu0 0.0
        %925 = vmatprep.subr.mxu0 0.0
        %926 = vmatpush2.msra.mxu0 0.0
        %927 = vmatprep.subr.mxu0 0.0
        %928 = vmatpush2.msra.mxu0 0.0
        %929 = vmatprep.subr.mxu0 0.0
        %930 = vmatpush2.msra.mxu0 0.0
        %931 = vmatprep.subr.mxu0 0.0
        %932 = vmatpush2.msra.mxu0 0.0
        %933 = vmatprep.subr.mxu0 0.0
        %934 = vmatpush2.msra.mxu0 0.0
        %935 = vmatprep.subr.mxu0 0.0
        %936 = vmatpush2.msra.mxu0 0.0
        %937 = vmatprep.mubr.f32.mxu0 0.0
        %938 = vmatmul.mubr.f32.gmra.mxu0 %v867
        %v939 = vpop.f32.mrf.mxu0
        %v940 = vadd.f32 0.0, %v939
        %v941 = vpop.f32.mrf.mxu0
        %v942 = vadd.f32 0.0, %v941
        %943 = vdwg.mxu0
        %v944 = vadd.f32 %v827, %v940
        %v945 = vadd.f32 %v828, %v942
        %v946 = vld [vmem:[#allocation2] sm:$0xff]
        %v947 = vld [vmem:[#allocation2 + $0x8] sm:$0xf]
        %s948 = scalar_lea.vmem %s1, 12
        %v949 = vld [vmem:[%s948] sm:$0x3]
        %v951 = vlaneseq
        %v952 = vshrl.u32 %v951, 7
        %v953 = vsub.s32 0, %v952
        %v954 = vrot.slane %v949, %v953
        %v955 = vlaneseq
        %v956 = vshrl.u32 %v955, 7
        %v957 = vsub.s32 1, %v956
        %v958 = vrot.slane %v949, %v957
        %v959 = vcombine.low %v954, %v958
        %960 = vrot.lane.b32.xlu0 %v959, 32
        %v961 = vpop.permute.xlu0 %960
        %v962 = vrot.slane %v961, 4
        %vm963 = vcmask 261120
        %v964 = vsel %vm963, %v962, %v961
        %v967 = vmul.f32 %v946, %v964
        %v968 = vmul.f32 %v947, %v962
        %s969 = scalar_lea.vmem %s2, 24
        %v970 = vld [vmem:[%s969] sm:$0xf]
        %v973 = vcombine.high %v967, %v967
        %974 = vrot.lane.b32.xlu0 %v967, 96
        %v975 = vpop.permute.xlu0 %974
        %976 = vrot.lane.b32.xlu0 %v973, 96
        %v977 = vpop.permute.xlu0 %976
        %978 = vrot.lane.b32.xlu0 %v968, 96
        %v979 = vpop.permute.xlu0 %978
        %vm980 = vcmask 785408
        %v981 = vsel %vm980, %v975, %v977
        %v982 = vsel %vm980, %v977, %v979
        %v984 = vsel %vm319, %v970, 0
        %v986 = vsel %vm323, %v981, 0
        %v988 = vsel %vm323, %v982, 0
        %990 = vmatprep.subr.mxu0 0.0
        %991 = vmatpush1.msra.mxu0 0.0
        %992 = vmatprep.subr.mxu0 0.0
        %993 = vmatpush1.msra.mxu0 0.0
        %994 = vmatprep.subr.mxu0 0.0
        %995 = vmatpush1.msra.mxu0 0.0
        %996 = vmatprep.subr.mxu0 0.0
        %997 = vmatpush1.msra.mxu0 0.0
        %998 = vmatprep.subr.mxu0 0.0
        %999 = vmatpush1.msra.mxu0 0.0
        %1000 = vmatprep.subr.mxu0 0.0
        %1001 = vmatpush1.msra.mxu0 0.0
        %1002 = vmatprep.subr.mxu0 0.0
        %1003 = vmatpush1.msra.mxu0 0.0
        %1004 = vmatprep.subr.mxu0 0.0
        %1005 = vmatpush1.msra.mxu0 0.0
        %1006 = vmatprep.subr.mxu0 0.0
        %1007 = vmatpush1.msra.mxu0 0.0
        %1008 = vmatprep.subr.mxu0 0.0
        %1009 = vmatpush1.msra.mxu0 0.0
        %1010 = vmatprep.subr.mxu0 0.0
        %1011 = vmatpush1.msra.mxu0 0.0
        %1012 = vmatprep.subr.mxu0 0.0
        %1013 = vmatpush1.msra.mxu0 0.0
        %1014 = vmatprep.subr.mxu0 0.0
        %1015 = vmatpush1.msra.mxu0 0.0
        %1016 = vmatprep.subr.mxu0 0.0
        %1017 = vmatpush1.msra.mxu0 0.0
        %1018 = vmatprep.subr.mxu0 0.0
        %1019 = vmatpush1.msra.mxu0 0.0
        %1020 = vmatprep.subr.mxu0 %v988
        %1021 = vmatpush1.msra.mxu0 %v986
        %1022 = vmatprep.subr.mxu0 0.0
        %1023 = vmatpush2.msra.mxu0 0.0
        %1024 = vmatprep.subr.mxu0 0.0
        %1025 = vmatpush2.msra.mxu0 0.0
        %1026 = vmatprep.subr.mxu0 0.0
        %1027 = vmatpush2.msra.mxu0 0.0
        %1028 = vmatprep.subr.mxu0 0.0
        %1029 = vmatpush2.msra.mxu0 0.0
        %1030 = vmatprep.subr.mxu0 0.0
        %1031 = vmatpush2.msra.mxu0 0.0
        %1032 = vmatprep.subr.mxu0 0.0
        %1033 = vmatpush2.msra.mxu0 0.0
        %1034 = vmatprep.subr.mxu0 0.0
        %1035 = vmatpush2.msra.mxu0 0.0
        %1036 = vmatprep.subr.mxu0 0.0
        %1037 = vmatpush2.msra.mxu0 0.0
        %1038 = vmatprep.subr.mxu0 0.0
        %1039 = vmatpush2.msra.mxu0 0.0
        %1040 = vmatprep.subr.mxu0 0.0
        %1041 = vmatpush2.msra.mxu0 0.0
        %1042 = vmatprep.subr.mxu0 0.0
        %1043 = vmatpush2.msra.mxu0 0.0
        %1044 = vmatprep.subr.mxu0 0.0
        %1045 = vmatpush2.msra.mxu0 0.0
        %1046 = vmatprep.subr.mxu0 0.0
        %1047 = vmatpush2.msra.mxu0 0.0
        %1048 = vmatprep.subr.mxu0 0.0
        %1049 = vmatpush2.msra.mxu0 0.0
        %1050 = vmatprep.subr.mxu0 0.0
        %1051 = vmatpush2.msra.mxu0 0.0
        %1052 = vmatprep.subr.mxu0 0.0
        %1053 = vmatpush2.msra.mxu0 0.0
        %1054 = vmatprep.mubr.f32.mxu0 0.0
        %1055 = vmatmul.mubr.f32.gmra.mxu0 %v984
        %v1056 = vpop.f32.mrf.mxu0
        %v1057 = vadd.f32 0.0, %v1056
        %v1058 = vpop.f32.mrf.mxu0
        %v1059 = vadd.f32 0.0, %v1058
        %1060 = vdwg.mxu0
        %v1061 = vadd.f32 %v944, %v1057
        %v1062 = vadd.f32 %v945, %v1059
        %v1063 = vld [vmem:[#allocation2] sm:$0xff]
        %v1064 = vld [vmem:[#allocation2 + $0x8] sm:$0xf]
        %s1065 = scalar_lea.vmem %s1, 14
        %v1066 = vld [vmem:[%s1065] sm:$0x3]
        %v1068 = vlaneseq
        %v1069 = vshrl.u32 %v1068, 7
        %v1070 = vsub.s32 0, %v1069
        %v1071 = vrot.slane %v1066, %v1070
        %v1072 = vlaneseq
        %v1073 = vshrl.u32 %v1072, 7
        %v1074 = vsub.s32 1, %v1073
        %v1075 = vrot.slane %v1066, %v1074
        %v1076 = vcombine.low %v1071, %v1075
        %1077 = vrot.lane.b32.xlu0 %v1076, 33
        %v1078 = vpop.permute.xlu0 %1077
        %v1079 = vrot.slane %v1078, 4
        %vm1080 = vcmask 269312
        %v1081 = vsel %vm1080, %v1079, %v1078
        %v1084 = vmul.f32 %v1063, %v1081
        %v1085 = vmul.f32 %v1064, %v1079
        %s1086 = scalar_lea.vmem %s2, 28
        %v1087 = vld [vmem:[%s1086] sm:$0xf]
        %v1090 = vcombine.high %v1084, %v1084
        %1091 = vrot.lane.b32.xlu0 %v1084, 95
        %v1092 = vpop.permute.xlu0 %1091
        %1093 = vrot.lane.b32.xlu0 %v1090, 95
        %v1094 = vpop.permute.xlu0 %1093
        %1095 = vrot.lane.b32.xlu0 %v1085, 95
        %v1096 = vpop.permute.xlu0 %1095
        %vm1097 = vcmask 777216
        %v1098 = vsel %vm1097, %v1092, %v1094
        %v1099 = vsel %vm1097, %v1094, %v1096
        %v1101 = vsel %vm319, %v1087, 0
        %v1103 = vsel %vm323, %v1098, 0
        %v1105 = vsel %vm323, %v1099, 0
        %1107 = vmatprep.subr.mxu0 0.0
        %1108 = vmatpush1.msra.mxu0 0.0
        %1109 = vmatprep.subr.mxu0 0.0
        %1110 = vmatpush1.msra.mxu0 0.0
        %1111 = vmatprep.subr.mxu0 0.0
        %1112 = vmatpush1.msra.mxu0 0.0
        %1113 = vmatprep.subr.mxu0 0.0
        %1114 = vmatpush1.msra.mxu0 0.0
        %1115 = vmatprep.subr.mxu0 0.0
        %1116 = vmatpush1.msra.mxu0 0.0
        %1117 = vmatprep.subr.mxu0 0.0
        %1118 = vmatpush1.msra.mxu0 0.0
        %1119 = vmatprep.subr.mxu0 0.0
        %1120 = vmatpush1.msra.mxu0 0.0
        %1121 = vmatprep.subr.mxu0 0.0
        %1122 = vmatpush1.msra.mxu0 0.0
        %1123 = vmatprep.subr.mxu0 0.0
        %1124 = vmatpush1.msra.mxu0 0.0
        %1125 = vmatprep.subr.mxu0 0.0
        %1126 = vmatpush1.msra.mxu0 0.0
        %1127 = vmatprep.subr.mxu0 0.0
        %1128 = vmatpush1.msra.mxu0 0.0
        %1129 = vmatprep.subr.mxu0 0.0
        %1130 = vmatpush1.msra.mxu0 0.0
        %1131 = vmatprep.subr.mxu0 0.0
        %1132 = vmatpush1.msra.mxu0 0.0
        %1133 = vmatprep.subr.mxu0 0.0
        %1134 = vmatpush1.msra.mxu0 0.0
        %1135 = vmatprep.subr.mxu0 0.0
        %1136 = vmatpush1.msra.mxu0 0.0
        %1137 = vmatprep.subr.mxu0 %v1105
        %1138 = vmatpush1.msra.mxu0 %v1103
        %1139 = vmatprep.subr.mxu0 0.0
        %1140 = vmatpush2.msra.mxu0 0.0
        %1141 = vmatprep.subr.mxu0 0.0
        %1142 = vmatpush2.msra.mxu0 0.0
        %1143 = vmatprep.subr.mxu0 0.0
        %1144 = vmatpush2.msra.mxu0 0.0
        %1145 = vmatprep.subr.mxu0 0.0
        %1146 = vmatpush2.msra.mxu0 0.0
        %1147 = vmatprep.subr.mxu0 0.0
        %1148 = vmatpush2.msra.mxu0 0.0
        %1149 = vmatprep.subr.mxu0 0.0
        %1150 = vmatpush2.msra.mxu0 0.0
        %1151 = vmatprep.subr.mxu0 0.0
        %1152 = vmatpush2.msra.mxu0 0.0
        %1153 = vmatprep.subr.mxu0 0.0
        %1154 = vmatpush2.msra.mxu0 0.0
        %1155 = vmatprep.subr.mxu0 0.0
        %1156 = vmatpush2.msra.mxu0 0.0
        %1157 = vmatprep.subr.mxu0 0.0
        %1158 = vmatpush2.msra.mxu0 0.0
        %1159 = vmatprep.subr.mxu0 0.0
        %1160 = vmatpush2.msra.mxu0 0.0
        %1161 = vmatprep.subr.mxu0 0.0
        %1162 = vmatpush2.msra.mxu0 0.0
        %1163 = vmatprep.subr.mxu0 0.0
        %1164 = vmatpush2.msra.mxu0 0.0
        %1165 = vmatprep.subr.mxu0 0.0
        %1166 = vmatpush2.msra.mxu0 0.0
        %1167 = vmatprep.subr.mxu0 0.0
        %1168 = vmatpush2.msra.mxu0 0.0
        %1169 = vmatprep.subr.mxu0 0.0
        %1170 = vmatpush2.msra.mxu0 0.0
        %1171 = vmatprep.mubr.f32.mxu0 0.0
        %1172 = vmatmul.mubr.f32.gmra.mxu0 %v1101
        %v1173 = vpop.f32.mrf.mxu0
        %v1174 = vadd.f32 0.0, %v1173
        %v1175 = vpop.f32.mrf.mxu0
        %v1176 = vadd.f32 0.0, %v1175
        %1177 = vdwg.mxu0
        %v1178 = vadd.f32 %v1061, %v1174
        %v1179 = vadd.f32 %v1062, %v1176
        %v1180 = vld [vmem:[#allocation2] sm:$0xff]
        %v1181 = vld [vmem:[#allocation2 + $0x8] sm:$0xf]
        %s1182 = scalar_lea.vmem %s1, 16
        %v1183 = vld [vmem:[%s1182] sm:$0x3]
        %v1185 = vlaneseq
        %v1186 = vshrl.u32 %v1185, 7
        %v1187 = vsub.s32 0, %v1186
        %v1188 = vrot.slane %v1183, %v1187
        %v1189 = vlaneseq
        %v1190 = vshrl.u32 %v1189, 7
        %v1191 = vsub.s32 1, %v1190
        %v1192 = vrot.slane %v1183, %v1191
        %v1193 = vcombine.low %v1188, %v1192
        %1194 = vrot.lane.b32.xlu0 %v1193, 34
        %v1195 = vpop.permute.xlu0 %1194
        %v1196 = vrot.slane %v1195, 4
        %vm1197 = vcmask 277504
        %v1198 = vsel %vm1197, %v1196, %v1195
        %v1201 = vmul.f32 %v1180, %v1198
        %v1202 = vmul.f32 %v1181, %v1196
        %s1203 = scalar_lea.vmem %s2, 32
        %v1204 = vld [vmem:[%s1203] sm:$0xf]
        %v1207 = vcombine.high %v1201, %v1201
        %1208 = vrot.lane.b32.xlu0 %v1201, 94
        %v1209 = vpop.permute.xlu0 %1208
        %1210 = vrot.lane.b32.xlu0 %v1207, 94
        %v1211 = vpop.permute.xlu0 %1210
        %1212 = vrot.lane.b32.xlu0 %v1202, 94
        %v1213 = vpop.permute.xlu0 %1212
        %vm1214 = vcmask 769024
        %v1215 = vsel %vm1214, %v1209, %v1211
        %v1216 = vsel %vm1214, %v1211, %v1213
        %v1218 = vsel %vm319, %v1204, 0
        %v1220 = vsel %vm323, %v1215, 0
        %v1222 = vsel %vm323, %v1216, 0
        %1224 = vmatprep.subr.mxu0 0.0
        %1225 = vmatpush1.msra.mxu0 0.0
        %1226 = vmatprep.subr.mxu0 0.0
        %1227 = vmatpush1.msra.mxu0 0.0
        %1228 = vmatprep.subr.mxu0 0.0
        %1229 = vmatpush1.msra.mxu0 0.0
        %1230 = vmatprep.subr.mxu0 0.0
        %1231 = vmatpush1.msra.mxu0 0.0
        %1232 = vmatprep.subr.mxu0 0.0
        %1233 = vmatpush1.msra.mxu0 0.0
        %1234 = vmatprep.subr.mxu0 0.0
        %1235 = vmatpush1.msra.mxu0 0.0
        %1236 = vmatprep.subr.mxu0 0.0
        %1237 = vmatpush1.msra.mxu0 0.0
        %1238 = vmatprep.subr.mxu0 0.0
        %1239 = vmatpush1.msra.mxu0 0.0
        %1240 = vmatprep.subr.mxu0 0.0
        %1241 = vmatpush1.msra.mxu0 0.0
        %1242 = vmatprep.subr.mxu0 0.0
        %1243 = vmatpush1.msra.mxu0 0.0
        %1244 = vmatprep.subr.mxu0 0.0
        %1245 = vmatpush1.msra.mxu0 0.0
        %1246 = vmatprep.subr.mxu0 0.0
        %1247 = vmatpush1.msra.mxu0 0.0
        %1248 = vmatprep.subr.mxu0 0.0
        %1249 = vmatpush1.msra.mxu0 0.0
        %1250 = vmatprep.subr.mxu0 0.0
        %1251 = vmatpush1.msra.mxu0 0.0
        %1252 = vmatprep.subr.mxu0 0.0
        %1253 = vmatpush1.msra.mxu0 0.0
        %1254 = vmatprep.subr.mxu0 %v1222
        %1255 = vmatpush1.msra.mxu0 %v1220
        %1256 = vmatprep.subr.mxu0 0.0
        %1257 = vmatpush2.msra.mxu0 0.0
        %1258 = vmatprep.subr.mxu0 0.0
        %1259 = vmatpush2.msra.mxu0 0.0
        %1260 = vmatprep.subr.mxu0 0.0
        %1261 = vmatpush2.msra.mxu0 0.0
        %1262 = vmatprep.subr.mxu0 0.0
        %1263 = vmatpush2.msra.mxu0 0.0
        %1264 = vmatprep.subr.mxu0 0.0
        %1265 = vmatpush2.msra.mxu0 0.0
        %1266 = vmatprep.subr.mxu0 0.0
        %1267 = vmatpush2.msra.mxu0 0.0
        %1268 = vmatprep.subr.mxu0 0.0
        %1269 = vmatpush2.msra.mxu0 0.0
        %1270 = vmatprep.subr.mxu0 0.0
        %1271 = vmatpush2.msra.mxu0 0.0
        %1272 = vmatprep.subr.mxu0 0.0
        %1273 = vmatpush2.msra.mxu0 0.0
        %1274 = vmatprep.subr.mxu0 0.0
        %1275 = vmatpush2.msra.mxu0 0.0
        %1276 = vmatprep.subr.mxu0 0.0
        %1277 = vmatpush2.msra.mxu0 0.0
        %1278 = vmatprep.subr.mxu0 0.0
        %1279 = vmatpush2.msra.mxu0 0.0
        %1280 = vmatprep.subr.mxu0 0.0
        %1281 = vmatpush2.msra.mxu0 0.0
        %1282 = vmatprep.subr.mxu0 0.0
        %1283 = vmatpush2.msra.mxu0 0.0
        %1284 = vmatprep.subr.mxu0 0.0
        %1285 = vmatpush2.msra.mxu0 0.0
        %1286 = vmatprep.subr.mxu0 0.0
        %1287 = vmatpush2.msra.mxu0 0.0
        %1288 = vmatprep.mubr.f32.mxu0 0.0
        %1289 = vmatmul.mubr.f32.gmra.mxu0 %v1218
        %v1290 = vpop.f32.mrf.mxu0
        %v1291 = vadd.f32 0.0, %v1290
        %v1292 = vpop.f32.mrf.mxu0
        %v1293 = vadd.f32 0.0, %v1292
        %1294 = vdwg.mxu0
        %v1295 = vadd.f32 %v1178, %v1291
        %v1296 = vadd.f32 %v1179, %v1293
        %v1297 = vld [vmem:[%s3] sm:$0xf]
        %1299 = vset.pattern.permute.xlu0 0
        %1300 = vperm.xlu0 %1299, %v1297
        %v1301 = vpop.permute.xlu0 %1300
        %v1303 = vadd.f32 %v1295, %v1301
        %v1304 = vadd.f32 %v1296, %v1301
        %v1305 = vmax.f32 %v1303, 0.0
        %v1306 = vmax.f32 %v1304, 0.0
        %v1309 = vcombine.low %v1305, %v1306
        %1310 = vrot.lane.b32.xlu0 %v1309, 17
        %v1311 = vpop.permute.xlu0 %1310
        %v1312 = vrot.slane %v1311, 4
        %v1313 = vsel %vm258, %v1312, %v1311
        %1316 = vst.msk [vmem:[#allocation2] sm:$0xff] %vm264, %v1313
        %1317 = vst.msk [vmem:[#allocation2 + $0x8] sm:$0xf] %vm266, %v1312
        %v1318 = vld [vmem:[#allocation2] sm:$0xff]
        %v1319 = vld [vmem:[%s1] sm:$0x3]
        %v1321 = vlaneseq
        %v1322 = vshrl.u32 %v1321, 7
        %v1323 = vsub.s32 0, %v1322
        %v1324 = vrot.slane %v1319, %v1323
        %v1325 = vlaneseq
        %v1326 = vshrl.u32 %v1325, 7
        %v1327 = vsub.s32 1, %v1326
        %v1328 = vrot.slane %v1319, %v1327
        %v1329 = vcombine.low %v1324, %v1328
        %v1331 = vmul.f32 %v1318, %v1329
        %v1332 = vld [vmem:[%s4] sm:$0xf]
        %v1333 = vld [vmem:[#allocation2 + $0x8] sm:$0xf]
        %v1334 = vld [vmem:[%s284] sm:$0x3]
        %v1336 = vlaneseq
        %v1337 = vshrl.u32 %v1336, 7
        %v1338 = vsub.s32 0, %v1337
        %v1339 = vrot.slane %v1334, %v1338
        %v1340 = vlaneseq
        %v1341 = vshrl.u32 %v1340, 7
        %v1342 = vsub.s32 1, %v1341
        %v1343 = vrot.slane %v1334, %v1342
        %v1344 = vcombine.low %v1339, %v1343
        %1345 = vrot.lane.b32.xlu0 %v1344, 1
        %v1346 = vpop.permute.xlu0 %1345
        %v1347 = vrot.slane %v1346, 4
        %v1348 = vsel %vm299, %v1347, %v1346
        %v1351 = vmul.f32 %v1318, %v1348
        %v1352 = vmul.f32 %v1333, %v1347
        %s1353 = scalar_lea.vmem %s4, 4
        %v1354 = vld [vmem:[%s1353] sm:$0xf]
        %v1357 = vcombine.high %v1351, %v1351
        %1358 = vrot.lane.b32.xlu0 %v1351, 127
        %v1359 = vpop.permute.xlu0 %1358
        %1360 = vrot.lane.b32.xlu0 %v1357, 127
        %v1361 = vpop.permute.xlu0 %1360
        %1362 = vrot.lane.b32.xlu0 %v1352, 127
        %v1363 = vpop.permute.xlu0 %1362
        %v1364 = vsel %vm316, %v1359, %v1361
        %v1365 = vsel %vm316, %v1361, %v1363
        %v1367 = vsel %vm319, %v1354, 0
        %v1369 = vsel %vm323, %v1364, 0
        %v1371 = vsel %vm323, %v1365, 0
        %1373 = vmatprep.subr.mxu0 0.0
        %1374 = vmatpush1.msra.mxu0 0.0
        %1375 = vmatprep.subr.mxu0 0.0
        %1376 = vmatpush1.msra.mxu0 0.0
        %1377 = vmatprep.subr.mxu0 0.0
        %1378 = vmatpush1.msra.mxu0 0.0
        %1379 = vmatprep.subr.mxu0 0.0
        %1380 = vmatpush1.msra.mxu0 0.0
        %1381 = vmatprep.subr.mxu0 0.0
        %1382 = vmatpush1.msra.mxu0 0.0
        %1383 = vmatprep.subr.mxu0 0.0
        %1384 = vmatpush1.msra.mxu0 0.0
        %1385 = vmatprep.subr.mxu0 0.0
        %1386 = vmatpush1.msra.mxu0 0.0
        %1387 = vmatprep.subr.mxu0 0.0
        %1388 = vmatpush1.msra.mxu0 0.0
        %1389 = vmatprep.subr.mxu0 0.0
        %1390 = vmatpush1.msra.mxu0 0.0
        %1391 = vmatprep.subr.mxu0 0.0
        %1392 = vmatpush1.msra.mxu0 0.0
        %1393 = vmatprep.subr.mxu0 0.0
        %1394 = vmatpush1.msra.mxu0 0.0
        %1395 = vmatprep.subr.mxu0 0.0
        %1396 = vmatpush1.msra.mxu0 0.0
        %1397 = vmatprep.subr.mxu0 0.0
        %1398 = vmatpush1.msra.mxu0 0.0
        %1399 = vmatprep.subr.mxu0 0.0
        %1400 = vmatpush1.msra.mxu0 0.0
        %1401 = vmatprep.subr.mxu0 0.0
        %1402 = vmatpush1.msra.mxu0 0.0
        %1403 = vmatprep.subr.mxu0 %v1371
        %1404 = vmatpush1.msra.mxu0 %v1369
        %1405 = vmatprep.subr.mxu0 0.0
        %1406 = vmatpush2.msra.mxu0 0.0
        %1407 = vmatprep.subr.mxu0 0.0
        %1408 = vmatpush2.msra.mxu0 0.0
        %1409 = vmatprep.subr.mxu0 0.0
        %1410 = vmatpush2.msra.mxu0 0.0
        %1411 = vmatprep.subr.mxu0 0.0
        %1412 = vmatpush2.msra.mxu0 0.0
        %1413 = vmatprep.subr.mxu0 0.0
        %1414 = vmatpush2.msra.mxu0 0.0
        %1415 = vmatprep.subr.mxu0 0.0
        %1416 = vmatpush2.msra.mxu0 0.0
        %1417 = vmatprep.subr.mxu0 0.0
        %1418 = vmatpush2.msra.mxu0 0.0
        %1419 = vmatprep.subr.mxu0 0.0
        %1420 = vmatpush2.msra.mxu0 0.0
        %1421 = vmatprep.subr.mxu0 0.0
        %1422 = vmatpush2.msra.mxu0 0.0
        %1423 = vmatprep.subr.mxu0 0.0
        %1424 = vmatpush2.msra.mxu0 0.0
        %1425 = vmatprep.subr.mxu0 0.0
        %1426 = vmatpush2.msra.mxu0 0.0
        %1427 = vmatprep.subr.mxu0 0.0
        %1428 = vmatpush2.msra.mxu0 0.0
        %1429 = vmatprep.subr.mxu0 0.0
        %1430 = vmatpush2.msra.mxu0 0.0
        %1431 = vmatprep.subr.mxu0 0.0
        %1432 = vmatpush2.msra.mxu0 0.0
        %1433 = vmatprep.subr.mxu0 0.0
        %1434 = vmatpush2.msra.mxu0 0.0
        %1435 = vmatprep.subr.mxu0 0.0
        %1436 = vmatpush2.msra.mxu0 0.0
        %1437 = vmatprep.mubr.f32.mxu0 0.0
        %1438 = vmatmul.mubr.f32.gmra.mxu0 %v1367
        %v1439 = vpop.f32.mrf.mxu0
        %v1440 = vadd.f32 0.0, %v1439
        %v1441 = vpop.f32.mrf.mxu0
        %v1442 = vadd.f32 0.0, %v1441
        %1443 = vdwg.mxu0
        %v1445 = vcombine.high %v1331, %v1331
        %v1447 = vsel %vm319, %v1332, 0
        %v1449 = vsel %vm323, %v1331, 0
        %v1451 = vsel %vm323, %v1445, 0
        %1453 = vmatprep.subr.mxu0 0.0
        %1454 = vmatpush1.msra.mxu0 0.0
        %1455 = vmatprep.subr.mxu0 0.0
        %1456 = vmatpush1.msra.mxu0 0.0
        %1457 = vmatprep.subr.mxu0 0.0
        %1458 = vmatpush1.msra.mxu0 0.0
        %1459 = vmatprep.subr.mxu0 0.0
        %1460 = vmatpush1.msra.mxu0 0.0
        %1461 = vmatprep.subr.mxu0 0.0
        %1462 = vmatpush1.msra.mxu0 0.0
        %1463 = vmatprep.subr.mxu0 0.0
        %1464 = vmatpush1.msra.mxu0 0.0
        %1465 = vmatprep.subr.mxu0 0.0
        %1466 = vmatpush1.msra.mxu0 0.0
        %1467 = vmatprep.subr.mxu0 0.0
        %1468 = vmatpush1.msra.mxu0 0.0
        %1469 = vmatprep.subr.mxu0 0.0
        %1470 = vmatpush1.msra.mxu0 0.0
        %1471 = vmatprep.subr.mxu0 0.0
        %1472 = vmatpush1.msra.mxu0 0.0
        %1473 = vmatprep.subr.mxu0 0.0
        %1474 = vmatpush1.msra.mxu0 0.0
        %1475 = vmatprep.subr.mxu0 0.0
        %1476 = vmatpush1.msra.mxu0 0.0
        %1477 = vmatprep.subr.mxu0 0.0
        %1478 = vmatpush1.msra.mxu0 0.0
        %1479 = vmatprep.subr.mxu0 0.0
        %1480 = vmatpush1.msra.mxu0 0.0
        %1481 = vmatprep.subr.mxu0 0.0
        %1482 = vmatpush1.msra.mxu0 0.0
        %1483 = vmatprep.subr.mxu0 %v1451
        %1484 = vmatpush1.msra.mxu0 %v1449
        %1485 = vmatprep.subr.mxu0 0.0
        %1486 = vmatpush2.msra.mxu0 0.0
        %1487 = vmatprep.subr.mxu0 0.0
        %1488 = vmatpush2.msra.mxu0 0.0
        %1489 = vmatprep.subr.mxu0 0.0
        %1490 = vmatpush2.msra.mxu0 0.0
        %1491 = vmatprep.subr.mxu0 0.0
        %1492 = vmatpush2.msra.mxu0 0.0
        %1493 = vmatprep.subr.mxu0 0.0
        %1494 = vmatpush2.msra.mxu0 0.0
        %1495 = vmatprep.subr.mxu0 0.0
        %1496 = vmatpush2.msra.mxu0 0.0
        %1497 = vmatprep.subr.mxu0 0.0
        %1498 = vmatpush2.msra.mxu0 0.0
        %1499 = vmatprep.subr.mxu0 0.0
        %1500 = vmatpush2.msra.mxu0 0.0
        %1501 = vmatprep.subr.mxu0 0.0
        %1502 = vmatpush2.msra.mxu0 0.0
        %1503 = vmatprep.subr.mxu0 0.0
        %1504 = vmatpush2.msra.mxu0 0.0
        %1505 = vmatprep.subr.mxu0 0.0
        %1506 = vmatpush2.msra.mxu0 0.0
        %1507 = vmatprep.subr.mxu0 0.0
        %1508 = vmatpush2.msra.mxu0 0.0
        %1509 = vmatprep.subr.mxu0 0.0
        %1510 = vmatpush2.msra.mxu0 0.0
        %1511 = vmatprep.subr.mxu0 0.0
        %1512 = vmatpush2.msra.mxu0 0.0
        %1513 = vmatprep.subr.mxu0 0.0
        %1514 = vmatpush2.msra.mxu0 0.0
        %1515 = vmatprep.subr.mxu0 0.0
        %1516 = vmatpush2.msra.mxu0 0.0
        %1517 = vmatprep.mubr.f32.mxu0 0.0
        %1518 = vmatmul.mubr.f32.gmra.mxu0 %v1447
        %v1519 = vpop.f32.mrf.mxu0
        %v1520 = vadd.f32 %v1440, %v1519
        %v1521 = vpop.f32.mrf.mxu0
        %v1522 = vadd.f32 %v1442, %v1521
        %1523 = vdwg.mxu0
        %v1524 = vld [vmem:[#allocation2] sm:$0xff]
        %v1525 = vld [vmem:[#allocation2 + $0x8] sm:$0xf]
        %v1526 = vld [vmem:[%s481] sm:$0x3]
        %v1528 = vlaneseq
        %v1529 = vshrl.u32 %v1528, 7
        %v1530 = vsub.s32 0, %v1529
        %v1531 = vrot.slane %v1526, %v1530
        %v1532 = vlaneseq
        %v1533 = vshrl.u32 %v1532, 7
        %v1534 = vsub.s32 1, %v1533
        %v1535 = vrot.slane %v1526, %v1534
        %v1536 = vcombine.low %v1531, %v1535
        %1537 = vrot.lane.b32.xlu0 %v1536, 2
        %v1538 = vpop.permute.xlu0 %1537
        %v1539 = vrot.slane %v1538, 4
        %v1540 = vsel %vm496, %v1539, %v1538
        %v1543 = vmul.f32 %v1524, %v1540
        %v1544 = vmul.f32 %v1525, %v1539
        %s1545 = scalar_lea.vmem %s4, 8
        %v1546 = vld [vmem:[%s1545] sm:$0xf]
        %v1549 = vcombine.high %v1543, %v1543
        %1550 = vrot.lane.b32.xlu0 %v1543, 126
        %v1551 = vpop.permute.xlu0 %1550
        %1552 = vrot.lane.b32.xlu0 %v1549, 126
        %v1553 = vpop.permute.xlu0 %1552
        %1554 = vrot.lane.b32.xlu0 %v1544, 126
        %v1555 = vpop.permute.xlu0 %1554
        %v1556 = vsel %vm513, %v1551, %v1553
        %v1557 = vsel %vm513, %v1553, %v1555
        %v1559 = vsel %vm319, %v1546, 0
        %v1561 = vsel %vm323, %v1556, 0
        %v1563 = vsel %vm323, %v1557, 0
        %1565 = vmatprep.subr.mxu0 0.0
        %1566 = vmatpush1.msra.mxu0 0.0
        %1567 = vmatprep.subr.mxu0 0.0
        %1568 = vmatpush1.msra.mxu0 0.0
        %1569 = vmatprep.subr.mxu0 0.0
        %1570 = vmatpush1.msra.mxu0 0.0
        %1571 = vmatprep.subr.mxu0 0.0
        %1572 = vmatpush1.msra.mxu0 0.0
        %1573 = vmatprep.subr.mxu0 0.0
        %1574 = vmatpush1.msra.mxu0 0.0
        %1575 = vmatprep.subr.mxu0 0.0
        %1576 = vmatpush1.msra.mxu0 0.0
        %1577 = vmatprep.subr.mxu0 0.0
        %1578 = vmatpush1.msra.mxu0 0.0
        %1579 = vmatprep.subr.mxu0 0.0
        %1580 = vmatpush1.msra.mxu0 0.0
        %1581 = vmatprep.subr.mxu0 0.0
        %1582 = vmatpush1.msra.mxu0 0.0
        %1583 = vmatprep.subr.mxu0 0.0
        %1584 = vmatpush1.msra.mxu0 0.0
        %1585 = vmatprep.subr.mxu0 0.0
        %1586 = vmatpush1.msra.mxu0 0.0
        %1587 = vmatprep.subr.mxu0 0.0
        %1588 = vmatpush1.msra.mxu0 0.0
        %1589 = vmatprep.subr.mxu0 0.0
        %1590 = vmatpush1.msra.mxu0 0.0
        %1591 = vmatprep.subr.mxu0 0.0
        %1592 = vmatpush1.msra.mxu0 0.0
        %1593 = vmatprep.subr.mxu0 0.0
        %1594 = vmatpush1.msra.mxu0 0.0
        %1595 = vmatprep.subr.mxu0 %v1563
        %1596 = vmatpush1.msra.mxu0 %v1561
        %1597 = vmatprep.subr.mxu0 0.0
        %1598 = vmatpush2.msra.mxu0 0.0
        %1599 = vmatprep.subr.mxu0 0.0
        %1600 = vmatpush2.msra.mxu0 0.0
        %1601 = vmatprep.subr.mxu0 0.0
        %1602 = vmatpush2.msra.mxu0 0.0
        %1603 = vmatprep.subr.mxu0 0.0
        %1604 = vmatpush2.msra.mxu0 0.0
        %1605 = vmatprep.subr.mxu0 0.0
        %1606 = vmatpush2.msra.mxu0 0.0
        %1607 = vmatprep.subr.mxu0 0.0
        %1608 = vmatpush2.msra.mxu0 0.0
        %1609 = vmatprep.subr.mxu0 0.0
        %1610 = vmatpush2.msra.mxu0 0.0
        %1611 = vmatprep.subr.mxu0 0.0
        %1612 = vmatpush2.msra.mxu0 0.0
        %1613 = vmatprep.subr.mxu0 0.0
        %1614 = vmatpush2.msra.mxu0 0.0
        %1615 = vmatprep.subr.mxu0 0.0
        %1616 = vmatpush2.msra.mxu0 0.0
        %1617 = vmatprep.subr.mxu0 0.0
        %1618 = vmatpush2.msra.mxu0 0.0
        %1619 = vmatprep.subr.mxu0 0.0
        %1620 = vmatpush2.msra.mxu0 0.0
        %1621 = vmatprep.subr.mxu0 0.0
        %1622 = vmatpush2.msra.mxu0 0.0
        %1623 = vmatprep.subr.mxu0 0.0
        %1624 = vmatpush2.msra.mxu0 0.0
        %1625 = vmatprep.subr.mxu0 0.0
        %1626 = vmatpush2.msra.mxu0 0.0
        %1627 = vmatprep.subr.mxu0 0.0
        %1628 = vmatpush2.msra.mxu0 0.0
        %1629 = vmatprep.mubr.f32.mxu0 0.0
        %1630 = vmatmul.mubr.f32.gmra.mxu0 %v1559
        %v1631 = vpop.f32.mrf.mxu0
        %v1632 = vadd.f32 0.0, %v1631
        %v1633 = vpop.f32.mrf.mxu0
        %v1634 = vadd.f32 0.0, %v1633
        %1635 = vdwg.mxu0
        %v1636 = vadd.f32 %v1520, %v1632
        %v1637 = vadd.f32 %v1522, %v1634
        %v1638 = vld [vmem:[#allocation2] sm:$0xff]
        %v1639 = vld [vmem:[#allocation2 + $0x8] sm:$0xf]
        %v1640 = vld [vmem:[%s598] sm:$0x3]
        %v1642 = vlaneseq
        %v1643 = vshrl.u32 %v1642, 7
        %v1644 = vsub.s32 0, %v1643
        %v1645 = vrot.slane %v1640, %v1644
        %v1646 = vlaneseq
        %v1647 = vshrl.u32 %v1646, 7
        %v1648 = vsub.s32 1, %v1647
        %v1649 = vrot.slane %v1640, %v1648
        %v1650 = vcombine.low %v1645, %v1649
        %1651 = vrot.lane.b32.xlu0 %v1650, 16
        %v1652 = vpop.permute.xlu0 %1651
        %v1653 = vrot.slane %v1652, 4
        %v1654 = vsel %vm613, %v1653, %v1652
        %v1657 = vmul.f32 %v1638, %v1654
        %v1658 = vmul.f32 %v1639, %v1653
        %s1659 = scalar_lea.vmem %s4, 12
        %v1660 = vld [vmem:[%s1659] sm:$0xf]
        %v1663 = vcombine.high %v1657, %v1657
        %1664 = vrot.lane.b32.xlu0 %v1657, 112
        %v1665 = vpop.permute.xlu0 %1664
        %1666 = vrot.lane.b32.xlu0 %v1663, 112
        %v1667 = vpop.permute.xlu0 %1666
        %1668 = vrot.lane.b32.xlu0 %v1658, 112
        %v1669 = vpop.permute.xlu0 %1668
        %v1670 = vsel %vm630, %v1665, %v1667
        %v1671 = vsel %vm630, %v1667, %v1669
        %v1673 = vsel %vm319, %v1660, 0
        %v1675 = vsel %vm323, %v1670, 0
        %v1677 = vsel %vm323, %v1671, 0
        %1679 = vmatprep.subr.mxu0 0.0
        %1680 = vmatpush1.msra.mxu0 0.0
        %1681 = vmatprep.subr.mxu0 0.0
        %1682 = vmatpush1.msra.mxu0 0.0
        %1683 = vmatprep.subr.mxu0 0.0
        %1684 = vmatpush1.msra.mxu0 0.0
        %1685 = vmatprep.subr.mxu0 0.0
        %1686 = vmatpush1.msra.mxu0 0.0
        %1687 = vmatprep.subr.mxu0 0.0
        %1688 = vmatpush1.msra.mxu0 0.0
        %1689 = vmatprep.subr.mxu0 0.0
        %1690 = vmatpush1.msra.mxu0 0.0
        %1691 = vmatprep.subr.mxu0 0.0
        %1692 = vmatpush1.msra.mxu0 0.0
        %1693 = vmatprep.subr.mxu0 0.0
        %1694 = vmatpush1.msra.mxu0 0.0
        %1695 = vmatprep.subr.mxu0 0.0
        %1696 = vmatpush1.msra.mxu0 0.0
        %1697 = vmatprep.subr.mxu0 0.0
        %1698 = vmatpush1.msra.mxu0 0.0
        %1699 = vmatprep.subr.mxu0 0.0
        %1700 = vmatpush1.msra.mxu0 0.0
        %1701 = vmatprep.subr.mxu0 0.0
        %1702 = vmatpush1.msra.mxu0 0.0
        %1703 = vmatprep.subr.mxu0 0.0
        %1704 = vmatpush1.msra.mxu0 0.0
        %1705 = vmatprep.subr.mxu0 0.0
        %1706 = vmatpush1.msra.mxu0 0.0
        %1707 = vmatprep.subr.mxu0 0.0
        %1708 = vmatpush1.msra.mxu0 0.0
        %1709 = vmatprep.subr.mxu0 %v1677
        %1710 = vmatpush1.msra.mxu0 %v1675
        %1711 = vmatprep.subr.mxu0 0.0
        %1712 = vmatpush2.msra.mxu0 0.0
        %1713 = vmatprep.subr.mxu0 0.0
        %1714 = vmatpush2.msra.mxu0 0.0
        %1715 = vmatprep.subr.mxu0 0.0
        %1716 = vmatpush2.msra.mxu0 0.0
        %1717 = vmatprep.subr.mxu0 0.0
        %1718 = vmatpush2.msra.mxu0 0.0
        %1719 = vmatprep.subr.mxu0 0.0
        %1720 = vmatpush2.msra.mxu0 0.0
        %1721 = vmatprep.subr.mxu0 0.0
        %1722 = vmatpush2.msra.mxu0 0.0
        %1723 = vmatprep.subr.mxu0 0.0
        %1724 = vmatpush2.msra.mxu0 0.0
        %1725 = vmatprep.subr.mxu0 0.0
        %1726 = vmatpush2.msra.mxu0 0.0
        %1727 = vmatprep.subr.mxu0 0.0
        %1728 = vmatpush2.msra.mxu0 0.0
        %1729 = vmatprep.subr.mxu0 0.0
        %1730 = vmatpush2.msra.mxu0 0.0
        %1731 = vmatprep.subr.mxu0 0.0
        %1732 = vmatpush2.msra.mxu0 0.0
        %1733 = vmatprep.subr.mxu0 0.0
        %1734 = vmatpush2.msra.mxu0 0.0
        %1735 = vmatprep.subr.mxu0 0.0
        %1736 = vmatpush2.msra.mxu0 0.0
        %1737 = vmatprep.subr.mxu0 0.0
        %1738 = vmatpush2.msra.mxu0 0.0
        %1739 = vmatprep.subr.mxu0 0.0
        %1740 = vmatpush2.msra.mxu0 0.0
        %1741 = vmatprep.subr.mxu0 0.0
        %1742 = vmatpush2.msra.mxu0 0.0
        %1743 = vmatprep.mubr.f32.mxu0 0.0
        %1744 = vmatmul.mubr.f32.gmra.mxu0 %v1673
        %v1745 = vpop.f32.mrf.mxu0
        %v1746 = vadd.f32 0.0, %v1745
        %v1747 = vpop.f32.mrf.mxu0
        %v1748 = vadd.f32 0.0, %v1747
        %1749 = vdwg.mxu0
        %v1750 = vadd.f32 %v1636, %v1746
        %v1751 = vadd.f32 %v1637, %v1748
        %v1752 = vld [vmem:[#allocation2] sm:$0xff]
        %v1753 = vld [vmem:[#allocation2 + $0x8] sm:$0xf]
        %v1754 = vld [vmem:[%s715] sm:$0x3]
        %v1756 = vlaneseq
        %v1757 = vshrl.u32 %v1756, 7
        %v1758 = vsub.s32 0, %v1757
        %v1759 = vrot.slane %v1754, %v1758
        %v1760 = vlaneseq
        %v1761 = vshrl.u32 %v1760, 7
        %v1762 = vsub.s32 1, %v1761
        %v1763 = vrot.slane %v1754, %v1762
        %v1764 = vcombine.low %v1759, %v1763
        %1765 = vrot.lane.b32.xlu0 %v1764, 17
        %v1766 = vpop.permute.xlu0 %1765
        %v1767 = vrot.slane %v1766, 4
        %v1768 = vsel %vm258, %v1767, %v1766
        %v1771 = vmul.f32 %v1752, %v1768
        %v1772 = vmul.f32 %v1753, %v1767
        %s1773 = scalar_lea.vmem %s4, 16
        %v1774 = vld [vmem:[%s1773] sm:$0xf]
        %v1777 = vcombine.high %v1771, %v1771
        %1778 = vrot.lane.b32.xlu0 %v1771, 111
        %v1779 = vpop.permute.xlu0 %1778
        %1780 = vrot.lane.b32.xlu0 %v1777, 111
        %v1781 = vpop.permute.xlu0 %1780
        %1782 = vrot.lane.b32.xlu0 %v1772, 111
        %v1783 = vpop.permute.xlu0 %1782
        %v1784 = vsel %vm746, %v1779, %v1781
        %v1785 = vsel %vm746, %v1781, %v1783
        %v1787 = vsel %vm319, %v1774, 0
        %v1789 = vsel %vm323, %v1784, 0
        %v1791 = vsel %vm323, %v1785, 0
        %1793 = vmatprep.subr.mxu0 0.0
        %1794 = vmatpush1.msra.mxu0 0.0
        %1795 = vmatprep.subr.mxu0 0.0
        %1796 = vmatpush1.msra.mxu0 0.0
        %1797 = vmatprep.subr.mxu0 0.0
        %1798 = vmatpush1.msra.mxu0 0.0
        %1799 = vmatprep.subr.mxu0 0.0
        %1800 = vmatpush1.msra.mxu0 0.0
        %1801 = vmatprep.subr.mxu0 0.0
        %1802 = vmatpush1.msra.mxu0 0.0
        %1803 = vmatprep.subr.mxu0 0.0
        %1804 = vmatpush1.msra.mxu0 0.0
        %1805 = vmatprep.subr.mxu0 0.0
        %1806 = vmatpush1.msra.mxu0 0.0
        %1807 = vmatprep.subr.mxu0 0.0
        %1808 = vmatpush1.msra.mxu0 0.0
        %1809 = vmatprep.subr.mxu0 0.0
        %1810 = vmatpush1.msra.mxu0 0.0
        %1811 = vmatprep.subr.mxu0 0.0
        %1812 = vmatpush1.msra.mxu0 0.0
        %1813 = vmatprep.subr.mxu0 0.0
        %1814 = vmatpush1.msra.mxu0 0.0
        %1815 = vmatprep.subr.mxu0 0.0
        %1816 = vmatpush1.msra.mxu0 0.0
        %1817 = vmatprep.subr.mxu0 0.0
        %1818 = vmatpush1.msra.mxu0 0.0
        %1819 = vmatprep.subr.mxu0 0.0
        %1820 = vmatpush1.msra.mxu0 0.0
        %1821 = vmatprep.subr.mxu0 0.0
        %1822 = vmatpush1.msra.mxu0 0.0
        %1823 = vmatprep.subr.mxu0 %v1791
        %1824 = vmatpush1.msra.mxu0 %v1789
        %1825 = vmatprep.subr.mxu0 0.0
        %1826 = vmatpush2.msra.mxu0 0.0
        %1827 = vmatprep.subr.mxu0 0.0
        %1828 = vmatpush2.msra.mxu0 0.0
        %1829 = vmatprep.subr.mxu0 0.0
        %1830 = vmatpush2.msra.mxu0 0.0
        %1831 = vmatprep.subr.mxu0 0.0
        %1832 = vmatpush2.msra.mxu0 0.0
        %1833 = vmatprep.subr.mxu0 0.0
        %1834 = vmatpush2.msra.mxu0 0.0
        %1835 = vmatprep.subr.mxu0 0.0
        %1836 = vmatpush2.msra.mxu0 0.0
        %1837 = vmatprep.subr.mxu0 0.0
        %1838 = vmatpush2.msra.mxu0 0.0
        %1839 = vmatprep.subr.mxu0 0.0
        %1840 = vmatpush2.msra.mxu0 0.0
        %1841 = vmatprep.subr.mxu0 0.0
        %1842 = vmatpush2.msra.mxu0 0.0
        %1843 = vmatprep.subr.mxu0 0.0
        %1844 = vmatpush2.msra.mxu0 0.0
        %1845 = vmatprep.subr.mxu0 0.0
        %1846 = vmatpush2.msra.mxu0 0.0
        %1847 = vmatprep.subr.mxu0 0.0
        %1848 = vmatpush2.msra.mxu0 0.0
        %1849 = vmatprep.subr.mxu0 0.0
        %1850 = vmatpush2.msra.mxu0 0.0
        %1851 = vmatprep.subr.mxu0 0.0
        %1852 = vmatpush2.msra.mxu0 0.0
        %1853 = vmatprep.subr.mxu0 0.0
        %1854 = vmatpush2.msra.mxu0 0.0
        %1855 = vmatprep.subr.mxu0 0.0
        %1856 = vmatpush2.msra.mxu0 0.0
        %1857 = vmatprep.mubr.f32.mxu0 0.0
        %1858 = vmatmul.mubr.f32.gmra.mxu0 %v1787
        %v1859 = vpop.f32.mrf.mxu0
        %v1860 = vadd.f32 0.0, %v1859
        %v1861 = vpop.f32.mrf.mxu0
        %v1862 = vadd.f32 0.0, %v1861
        %1863 = vdwg.mxu0
        %v1864 = vadd.f32 %v1750, %v1860
        %v1865 = vadd.f32 %v1751, %v1862
        %v1866 = vld [vmem:[#allocation2] sm:$0xff]
        %v1867 = vld [vmem:[#allocation2 + $0x8] sm:$0xf]
        %v1868 = vld [vmem:[%s831] sm:$0x3]
        %v1870 = vlaneseq
        %v1871 = vshrl.u32 %v1870, 7
        %v1872 = vsub.s32 0, %v1871
        %v1873 = vrot.slane %v1868, %v1872
        %v1874 = vlaneseq
        %v1875 = vshrl.u32 %v1874, 7
        %v1876 = vsub.s32 1, %v1875
        %v1877 = vrot.slane %v1868, %v1876
        %v1878 = vcombine.low %v1873, %v1877
        %1879 = vrot.lane.b32.xlu0 %v1878, 18
        %v1880 = vpop.permute.xlu0 %1879
        %v1881 = vrot.slane %v1880, 4
        %v1882 = vsel %vm846, %v1881, %v1880
        %v1885 = vmul.f32 %v1866, %v1882
        %v1886 = vmul.f32 %v1867, %v1881
        %s1887 = scalar_lea.vmem %s4, 20
        %v1888 = vld [vmem:[%s1887] sm:$0xf]
        %v1891 = vcombine.high %v1885, %v1885
        %1892 = vrot.lane.b32.xlu0 %v1885, 110
        %v1893 = vpop.permute.xlu0 %1892
        %1894 = vrot.lane.b32.xlu0 %v1891, 110
        %v1895 = vpop.permute.xlu0 %1894
        %1896 = vrot.lane.b32.xlu0 %v1886, 110
        %v1897 = vpop.permute.xlu0 %1896
        %v1898 = vsel %vm863, %v1893, %v1895
        %v1899 = vsel %vm863, %v1895, %v1897
        %v1901 = vsel %vm319, %v1888, 0
        %v1903 = vsel %vm323, %v1898, 0
        %v1905 = vsel %vm323, %v1899, 0
        %1907 = vmatprep.subr.mxu0 0.0
        %1908 = vmatpush1.msra.mxu0 0.0
        %1909 = vmatprep.subr.mxu0 0.0
        %1910 = vmatpush1.msra.mxu0 0.0
        %1911 = vmatprep.subr.mxu0 0.0
        %1912 = vmatpush1.msra.mxu0 0.0
        %1913 = vmatprep.subr.mxu0 0.0
        %1914 = vmatpush1.msra.mxu0 0.0
        %1915 = vmatprep.subr.mxu0 0.0
        %1916 = vmatpush1.msra.mxu0 0.0
        %1917 = vmatprep.subr.mxu0 0.0
        %1918 = vmatpush1.msra.mxu0 0.0
        %1919 = vmatprep.subr.mxu0 0.0
        %1920 = vmatpush1.msra.mxu0 0.0
        %1921 = vmatprep.subr.mxu0 0.0
        %1922 = vmatpush1.msra.mxu0 0.0
        %1923 = vmatprep.subr.mxu0 0.0
        %1924 = vmatpush1.msra.mxu0 0.0
        %1925 = vmatprep.subr.mxu0 0.0
        %1926 = vmatpush1.msra.mxu0 0.0
        %1927 = vmatprep.subr.mxu0 0.0
        %1928 = vmatpush1.msra.mxu0 0.0
        %1929 = vmatprep.subr.mxu0 0.0
        %1930 = vmatpush1.msra.mxu0 0.0
        %1931 = vmatprep.subr.mxu0 0.0
        %1932 = vmatpush1.msra.mxu0 0.0
        %1933 = vmatprep.subr.mxu0 0.0
        %1934 = vmatpush1.msra.mxu0 0.0
        %1935 = vmatprep.subr.mxu0 0.0
        %1936 = vmatpush1.msra.mxu0 0.0
        %1937 = vmatprep.subr.mxu0 %v1905
        %1938 = vmatpush1.msra.mxu0 %v1903
        %1939 = vmatprep.subr.mxu0 0.0
        %1940 = vmatpush2.msra.mxu0 0.0
        %1941 = vmatprep.subr.mxu0 0.0
        %1942 = vmatpush2.msra.mxu0 0.0
        %1943 = vmatprep.subr.mxu0 0.0
        %1944 = vmatpush2.msra.mxu0 0.0
        %1945 = vmatprep.subr.mxu0 0.0
        %1946 = vmatpush2.msra.mxu0 0.0
        %1947 = vmatprep.subr.mxu0 0.0
        %1948 = vmatpush2.msra.mxu0 0.0
        %1949 = vmatprep.subr.mxu0 0.0
        %1950 = vmatpush2.msra.mxu0 0.0
        %1951 = vmatprep.subr.mxu0 0.0
        %1952 = vmatpush2.msra.mxu0 0.0
        %1953 = vmatprep.subr.mxu0 0.0
        %1954 = vmatpush2.msra.mxu0 0.0
        %1955 = vmatprep.subr.mxu0 0.0
        %1956 = vmatpush2.msra.mxu0 0.0
        %1957 = vmatprep.subr.mxu0 0.0
        %1958 = vmatpush2.msra.mxu0 0.0
        %1959 = vmatprep.subr.mxu0 0.0
        %1960 = vmatpush2.msra.mxu0 0.0
        %1961 = vmatprep.subr.mxu0 0.0
        %1962 = vmatpush2.msra.mxu0 0.0
        %1963 = vmatprep.subr.mxu0 0.0
        %1964 = vmatpush2.msra.mxu0 0.0
        %1965 = vmatprep.subr.mxu0 0.0
        %1966 = vmatpush2.msra.mxu0 0.0
        %1967 = vmatprep.subr.mxu0 0.0
        %1968 = vmatpush2.msra.mxu0 0.0
        %1969 = vmatprep.subr.mxu0 0.0
        %1970 = vmatpush2.msra.mxu0 0.0
        %1971 = vmatprep.mubr.f32.mxu0 0.0
        %1972 = vmatmul.mubr.f32.gmra.mxu0 %v1901
        %v1973 = vpop.f32.mrf.mxu0
        %v1974 = vadd.f32 0.0, %v1973
        %v1975 = vpop.f32.mrf.mxu0
        %v1976 = vadd.f32 0.0, %v1975
        %1977 = vdwg.mxu0
        %v1978 = vadd.f32 %v1864, %v1974
        %v1979 = vadd.f32 %v1865, %v1976
        %v1980 = vld [vmem:[#allocation2] sm:$0xff]
        %v1981 = vld [vmem:[#allocation2 + $0x8] sm:$0xf]
        %v1982 = vld [vmem:[%s948] sm:$0x3]
        %v1984 = vlaneseq
        %v1985 = vshrl.u32 %v1984, 7
        %v1986 = vsub.s32 0, %v1985
        %v1987 = vrot.slane %v1982, %v1986
        %v1988 = vlaneseq
        %v1989 = vshrl.u32 %v1988, 7
        %v1990 = vsub.s32 1, %v1989
        %v1991 = vrot.slane %v1982, %v1990
        %v1992 = vcombine.low %v1987, %v1991
        %1993 = vrot.lane.b32.xlu0 %v1992, 32
        %v1994 = vpop.permute.xlu0 %1993
        %v1995 = vrot.slane %v1994, 4
        %v1996 = vsel %vm963, %v1995, %v1994
        %v1999 = vmul.f32 %v1980, %v1996
        %v2000 = vmul.f32 %v1981, %v1995
        %s2001 = scalar_lea.vmem %s4, 24
        %v2002 = vld [vmem:[%s2001] sm:$0xf]
        %v2005 = vcombine.high %v1999, %v1999
        %2006 = vrot.lane.b32.xlu0 %v1999, 96
        %v2007 = vpop.permute.xlu0 %2006
        %2008 = vrot.lane.b32.xlu0 %v2005, 96
        %v2009 = vpop.permute.xlu0 %2008
        %2010 = vrot.lane.b32.xlu0 %v2000, 96
        %v2011 = vpop.permute.xlu0 %2010
        %v2012 = vsel %vm980, %v2007, %v2009
        %v2013 = vsel %vm980, %v2009, %v2011
        %v2015 = vsel %vm319, %v2002, 0
        %v2017 = vsel %vm323, %v2012, 0
        %v2019 = vsel %vm323, %v2013, 0
        %2021 = vmatprep.subr.mxu0 0.0
        %2022 = vmatpush1.msra.mxu0 0.0
        %2023 = vmatprep.subr.mxu0 0.0
        %2024 = vmatpush1.msra.mxu0 0.0
        %2025 = vmatprep.subr.mxu0 0.0
        %2026 = vmatpush1.msra.mxu0 0.0
        %2027 = vmatprep.subr.mxu0 0.0
        %2028 = vmatpush1.msra.mxu0 0.0
        %2029 = vmatprep.subr.mxu0 0.0
        %2030 = vmatpush1.msra.mxu0 0.0
        %2031 = vmatprep.subr.mxu0 0.0
        %2032 = vmatpush1.msra.mxu0 0.0
        %2033 = vmatprep.subr.mxu0 0.0
        %2034 = vmatpush1.msra.mxu0 0.0
        %2035 = vmatprep.subr.mxu0 0.0
        %2036 = vmatpush1.msra.mxu0 0.0
        %2037 = vmatprep.subr.mxu0 0.0
        %2038 = vmatpush1.msra.mxu0 0.0
        %2039 = vmatprep.subr.mxu0 0.0
        %2040 = vmatpush1.msra.mxu0 0.0
        %2041 = vmatprep.subr.mxu0 0.0
        %2042 = vmatpush1.msra.mxu0 0.0
        %2043 = vmatprep.subr.mxu0 0.0
        %2044 = vmatpush1.msra.mxu0 0.0
        %2045 = vmatprep.subr.mxu0 0.0
        %2046 = vmatpush1.msra.mxu0 0.0
        %2047 = vmatprep.subr.mxu0 0.0
        %2048 = vmatpush1.msra.mxu0 0.0
        %2049 = vmatprep.subr.mxu0 0.0
        %2050 = vmatpush1.msra.mxu0 0.0
        %2051 = vmatprep.subr.mxu0 %v2019
        %2052 = vmatpush1.msra.mxu0 %v2017
        %2053 = vmatprep.subr.mxu0 0.0
        %2054 = vmatpush2.msra.mxu0 0.0
        %2055 = vmatprep.subr.mxu0 0.0
        %2056 = vmatpush2.msra.mxu0 0.0
        %2057 = vmatprep.subr.mxu0 0.0
        %2058 = vmatpush2.msra.mxu0 0.0
        %2059 = vmatprep.subr.mxu0 0.0
        %2060 = vmatpush2.msra.mxu0 0.0
        %2061 = vmatprep.subr.mxu0 0.0
        %2062 = vmatpush2.msra.mxu0 0.0
        %2063 = vmatprep.subr.mxu0 0.0
        %2064 = vmatpush2.msra.mxu0 0.0
        %2065 = vmatprep.subr.mxu0 0.0
        %2066 = vmatpush2.msra.mxu0 0.0
        %2067 = vmatprep.subr.mxu0 0.0
        %2068 = vmatpush2.msra.mxu0 0.0
        %2069 = vmatprep.subr.mxu0 0.0
        %2070 = vmatpush2.msra.mxu0 0.0
        %2071 = vmatprep.subr.mxu0 0.0
        %2072 = vmatpush2.msra.mxu0 0.0
        %2073 = vmatprep.subr.mxu0 0.0
        %2074 = vmatpush2.msra.mxu0 0.0
        %2075 = vmatprep.subr.mxu0 0.0
        %2076 = vmatpush2.msra.mxu0 0.0
        %2077 = vmatprep.subr.mxu0 0.0
        %2078 = vmatpush2.msra.mxu0 0.0
        %2079 = vmatprep.subr.mxu0 0.0
        %2080 = vmatpush2.msra.mxu0 0.0
        %2081 = vmatprep.subr.mxu0 0.0
        %2082 = vmatpush2.msra.mxu0 0.0
        %2083 = vmatprep.subr.mxu0 0.0
        %2084 = vmatpush2.msra.mxu0 0.0
        %2085 = vmatprep.mubr.f32.mxu0 0.0
        %2086 = vmatmul.mubr.f32.gmra.mxu0 %v2015
        %v2087 = vpop.f32.mrf.mxu0
        %v2088 = vadd.f32 0.0, %v2087
        %v2089 = vpop.f32.mrf.mxu0
        %v2090 = vadd.f32 0.0, %v2089
        %2091 = vdwg.mxu0
        %v2092 = vadd.f32 %v1978, %v2088
        %v2093 = vadd.f32 %v1979, %v2090
        %v2094 = vld [vmem:[#allocation2] sm:$0xff]
        %v2095 = vld [vmem:[#allocation2 + $0x8] sm:$0xf]
        %v2096 = vld [vmem:[%s1065] sm:$0x3]
        %v2098 = vlaneseq
        %v2099 = vshrl.u32 %v2098, 7
        %v2100 = vsub.s32 0, %v2099
        %v2101 = vrot.slane %v2096, %v2100
        %v2102 = vlaneseq
        %v2103 = vshrl.u32 %v2102, 7
        %v2104 = vsub.s32 1, %v2103
        %v2105 = vrot.slane %v2096, %v2104
        %v2106 = vcombine.low %v2101, %v2105
        %2107 = vrot.lane.b32.xlu0 %v2106, 33
        %v2108 = vpop.permute.xlu0 %2107
        %v2109 = vrot.slane %v2108, 4
        %v2110 = vsel %vm1080, %v2109, %v2108
        %v2113 = vmul.f32 %v2094, %v2110
        %v2114 = vmul.f32 %v2095, %v2109
        %s2115 = scalar_lea.vmem %s4, 28
        %v2116 = vld [vmem:[%s2115] sm:$0xf]
        %v2119 = vcombine.high %v2113, %v2113
        %2120 = vrot.lane.b32.xlu0 %v2113, 95
        %v2121 = vpop.permute.xlu0 %2120
        %2122 = vrot.lane.b32.xlu0 %v2119, 95
        %v2123 = vpop.permute.xlu0 %2122
        %2124 = vrot.lane.b32.xlu0 %v2114, 95
        %v2125 = vpop.permute.xlu0 %2124
        %v2126 = vsel %vm1097, %v2121, %v2123
        %v2127 = vsel %vm1097, %v2123, %v2125
        %v2129 = vsel %vm319, %v2116, 0
        %v2131 = vsel %vm323, %v2126, 0
        %v2133 = vsel %vm323, %v2127, 0
        %2135 = vmatprep.subr.mxu0 0.0
        %2136 = vmatpush1.msra.mxu0 0.0
        %2137 = vmatprep.subr.mxu0 0.0
        %2138 = vmatpush1.msra.mxu0 0.0
        %2139 = vmatprep.subr.mxu0 0.0
        %2140 = vmatpush1.msra.mxu0 0.0
        %2141 = vmatprep.subr.mxu0 0.0
        %2142 = vmatpush1.msra.mxu0 0.0
        %2143 = vmatprep.subr.mxu0 0.0
        %2144 = vmatpush1.msra.mxu0 0.0
        %2145 = vmatprep.subr.mxu0 0.0
        %2146 = vmatpush1.msra.mxu0 0.0
        %2147 = vmatprep.subr.mxu0 0.0
        %2148 = vmatpush1.msra.mxu0 0.0
        %2149 = vmatprep.subr.mxu0 0.0
        %2150 = vmatpush1.msra.mxu0 0.0
        %2151 = vmatprep.subr.mxu0 0.0
        %2152 = vmatpush1.msra.mxu0 0.0
        %2153 = vmatprep.subr.mxu0 0.0
        %2154 = vmatpush1.msra.mxu0 0.0
        %2155 = vmatprep.subr.mxu0 0.0
        %2156 = vmatpush1.msra.mxu0 0.0
        %2157 = vmatprep.subr.mxu0 0.0
        %2158 = vmatpush1.msra.mxu0 0.0
        %2159 = vmatprep.subr.mxu0 0.0
        %2160 = vmatpush1.msra.mxu0 0.0
        %2161 = vmatprep.subr.mxu0 0.0
        %2162 = vmatpush1.msra.mxu0 0.0
        %2163 = vmatprep.subr.mxu0 0.0
        %2164 = vmatpush1.msra.mxu0 0.0
        %2165 = vmatprep.subr.mxu0 %v2133
        %2166 = vmatpush1.msra.mxu0 %v2131
        %2167 = vmatprep.subr.mxu0 0.0
        %2168 = vmatpush2.msra.mxu0 0.0
        %2169 = vmatprep.subr.mxu0 0.0
        %2170 = vmatpush2.msra.mxu0 0.0
        %2171 = vmatprep.subr.mxu0 0.0
        %2172 = vmatpush2.msra.mxu0 0.0
        %2173 = vmatprep.subr.mxu0 0.0
        %2174 = vmatpush2.msra.mxu0 0.0
        %2175 = vmatprep.subr.mxu0 0.0
        %2176 = vmatpush2.msra.mxu0 0.0
        %2177 = vmatprep.subr.mxu0 0.0
        %2178 = vmatpush2.msra.mxu0 0.0
        %2179 = vmatprep.subr.mxu0 0.0
        %2180 = vmatpush2.msra.mxu0 0.0
        %2181 = vmatprep.subr.mxu0 0.0
        %2182 = vmatpush2.msra.mxu0 0.0
        %2183 = vmatprep.subr.mxu0 0.0
        %2184 = vmatpush2.msra.mxu0 0.0
        %2185 = vmatprep.subr.mxu0 0.0
        %2186 = vmatpush2.msra.mxu0 0.0
        %2187 = vmatprep.subr.mxu0 0.0
        %2188 = vmatpush2.msra.mxu0 0.0
        %2189 = vmatprep.subr.mxu0 0.0
        %2190 = vmatpush2.msra.mxu0 0.0
        %2191 = vmatprep.subr.mxu0 0.0
        %2192 = vmatpush2.msra.mxu0 0.0
        %2193 = vmatprep.subr.mxu0 0.0
        %2194 = vmatpush2.msra.mxu0 0.0
        %2195 = vmatprep.subr.mxu0 0.0
        %2196 = vmatpush2.msra.mxu0 0.0
        %2197 = vmatprep.subr.mxu0 0.0
        %2198 = vmatpush2.msra.mxu0 0.0
        %2199 = vmatprep.mubr.f32.mxu0 0.0
        %2200 = vmatmul.mubr.f32.gmra.mxu0 %v2129
        %v2201 = vpop.f32.mrf.mxu0
        %v2202 = vadd.f32 0.0, %v2201
        %v2203 = vpop.f32.mrf.mxu0
        %v2204 = vadd.f32 0.0, %v2203
        %2205 = vdwg.mxu0
        %v2206 = vadd.f32 %v2092, %v2202
        %v2207 = vadd.f32 %v2093, %v2204
        %v2208 = vld [vmem:[#allocation2] sm:$0xff]
        %v2209 = vld [vmem:[#allocation2 + $0x8] sm:$0xf]
        %v2210 = vld [vmem:[%s1182] sm:$0x3]
        %v2212 = vlaneseq
        %v2213 = vshrl.u32 %v2212, 7
        %v2214 = vsub.s32 0, %v2213
        %v2215 = vrot.slane %v2210, %v2214
        %v2216 = vlaneseq
        %v2217 = vshrl.u32 %v2216, 7
        %v2218 = vsub.s32 1, %v2217
        %v2219 = vrot.slane %v2210, %v2218
        %v2220 = vcombine.low %v2215, %v2219
        %2221 = vrot.lane.b32.xlu0 %v2220, 34
        %v2222 = vpop.permute.xlu0 %2221
        %v2223 = vrot.slane %v2222, 4
        %v2224 = vsel %vm1197, %v2223, %v2222
        %v2227 = vmul.f32 %v2208, %v2224
        %v2228 = vmul.f32 %v2209, %v2223
        %s2229 = scalar_lea.vmem %s4, 32
        %v2230 = vld [vmem:[%s2229] sm:$0xf]
        %v2233 = vcombine.high %v2227, %v2227
        %2234 = vrot.lane.b32.xlu0 %v2227, 94
        %v2235 = vpop.permute.xlu0 %2234
        %2236 = vrot.lane.b32.xlu0 %v2233, 94
        %v2237 = vpop.permute.xlu0 %2236
        %2238 = vrot.lane.b32.xlu0 %v2228, 94
        %v2239 = vpop.permute.xlu0 %2238
        %v2240 = vsel %vm1214, %v2235, %v2237
        %v2241 = vsel %vm1214, %v2237, %v2239
        %v2243 = vsel %vm319, %v2230, 0
        %v2245 = vsel %vm323, %v2240, 0
        %v2247 = vsel %vm323, %v2241, 0
        %2249 = vmatprep.subr.mxu0 0.0
        %2250 = vmatpush1.msra.mxu0 0.0
        %2251 = vmatprep.subr.mxu0 0.0
        %2252 = vmatpush1.msra.mxu0 0.0
        %2253 = vmatprep.subr.mxu0 0.0
        %2254 = vmatpush1.msra.mxu0 0.0
        %2255 = vmatprep.subr.mxu0 0.0
        %2256 = vmatpush1.msra.mxu0 0.0
        %2257 = vmatprep.subr.mxu0 0.0
        %2258 = vmatpush1.msra.mxu0 0.0
        %2259 = vmatprep.subr.mxu0 0.0
        %2260 = vmatpush1.msra.mxu0 0.0
        %2261 = vmatprep.subr.mxu0 0.0
        %2262 = vmatpush1.msra.mxu0 0.0
        %2263 = vmatprep.subr.mxu0 0.0
        %2264 = vmatpush1.msra.mxu0 0.0
        %2265 = vmatprep.subr.mxu0 0.0
        %2266 = vmatpush1.msra.mxu0 0.0
        %2267 = vmatprep.subr.mxu0 0.0
        %2268 = vmatpush1.msra.mxu0 0.0
        %2269 = vmatprep.subr.mxu0 0.0
        %2270 = vmatpush1.msra.mxu0 0.0
        %2271 = vmatprep.subr.mxu0 0.0
        %2272 = vmatpush1.msra.mxu0 0.0
        %2273 = vmatprep.subr.mxu0 0.0
        %2274 = vmatpush1.msra.mxu0 0.0
        %2275 = vmatprep.subr.mxu0 0.0
        %2276 = vmatpush1.msra.mxu0 0.0
        %2277 = vmatprep.subr.mxu0 0.0
        %2278 = vmatpush1.msra.mxu0 0.0
        %2279 = vmatprep.subr.mxu0 %v2247
        %2280 = vmatpush1.msra.mxu0 %v2245
        %2281 = vmatprep.subr.mxu0 0.0
        %2282 = vmatpush2.msra.mxu0 0.0
        %2283 = vmatprep.subr.mxu0 0.0
        %2284 = vmatpush2.msra.mxu0 0.0
        %2285 = vmatprep.subr.mxu0 0.0
        %2286 = vmatpush2.msra.mxu0 0.0
        %2287 = vmatprep.subr.mxu0 0.0
        %2288 = vmatpush2.msra.mxu0 0.0
        %2289 = vmatprep.subr.mxu0 0.0
        %2290 = vmatpush2.msra.mxu0 0.0
        %2291 = vmatprep.subr.mxu0 0.0
        %2292 = vmatpush2.msra.mxu0 0.0
        %2293 = vmatprep.subr.mxu0 0.0
        %2294 = vmatpush2.msra.mxu0 0.0
        %2295 = vmatprep.subr.mxu0 0.0
        %2296 = vmatpush2.msra.mxu0 0.0
        %2297 = vmatprep.subr.mxu0 0.0
        %2298 = vmatpush2.msra.mxu0 0.0
        %2299 = vmatprep.subr.mxu0 0.0
        %2300 = vmatpush2.msra.mxu0 0.0
        %2301 = vmatprep.subr.mxu0 0.0
        %2302 = vmatpush2.msra.mxu0 0.0
        %2303 = vmatprep.subr.mxu0 0.0
        %2304 = vmatpush2.msra.mxu0 0.0
        %2305 = vmatprep.subr.mxu0 0.0
        %2306 = vmatpush2.msra.mxu0 0.0
        %2307 = vmatprep.subr.mxu0 0.0
        %2308 = vmatpush2.msra.mxu0 0.0
        %2309 = vmatprep.subr.mxu0 0.0
        %2310 = vmatpush2.msra.mxu0 0.0
        %2311 = vmatprep.subr.mxu0 0.0
        %2312 = vmatpush2.msra.mxu0 0.0
        %2313 = vmatprep.mubr.f32.mxu0 0.0
        %2314 = vmatmul.mubr.f32.gmra.mxu0 %v2243
        %v2315 = vpop.f32.mrf.mxu0
        %v2316 = vadd.f32 0.0, %v2315
        %v2317 = vpop.f32.mrf.mxu0
        %v2318 = vadd.f32 0.0, %v2317
        %2319 = vdwg.mxu0
        %v2320 = vadd.f32 %v2206, %v2316
        %v2321 = vadd.f32 %v2207, %v2318
        %v2322 = vld [vmem:[%s5] sm:$0xf]
        %2324 = vset.pattern.permute.xlu0 0
        %2325 = vperm.xlu0 %2324, %v2322
        %v2326 = vpop.permute.xlu0 %2325
        %v2328 = vadd.f32 %v2320, %v2326
        %v2329 = vadd.f32 %v2321, %v2326
        %v2330 = vcombine.high %v250, %v250
        %v2332 = vadd.f32 %v2328, %v250
        %v2333 = vadd.f32 %v2329, %v2330
        %v2336 = vcombine.low %v2332, %v2333
        %2338 = vst [vmem:[%s244] sm:$0xff] %v2336
        %s2339 = sand.u32 %s159, 1
        %s2340 = scalar_lea.sflag [#allocation4], %s2339
        %s2341 = sand.u32 %s159, 1
        %s2342 = smul.addr %s2341, 8
        %s2343 = scalar_lea.vmem [#allocation3], %s2342
        // Predicated region
        $region45: #{tpu_custom_call.1} parent=43 // pred_check
          %p2344 = pneg %p169
        $region46: #{tpu_custom_call.1} parent=43 // pred_check_branch
          %2346 = sbr.rel (%p2344) target = $region48
        $region47: #{tpu_custom_call.1} parent=43 // pred_region
          %s2348 = ssub.s32 128, 128
          %2349 = vsyncadd %s2340, %s2348
          %s2350 = smul.addr %s20, 2
          %s2351 = smul.addr %s2350, 64
          %s2352 = scalar_lea.hbm %s6, %s2351
          %s2354 = sshll.u32 %s2343, 4
          %s2355 = int_to_ptr.vmem [resolvable:$true] %s2354
          %2357 = dma.vmem_to_hbm [thread:$0]  %s2355, 128, %s2352, %s2340
        $region48: #{tpu_custom_call.1} parent=43 // pred_fallthru
          _
      $region44: #{tpu_custom_call.1} parent=5 // pred_fallthru
        _
      %p2358 = scmp.le.s32.totalorder 2, %s15
      // Predicated region
      $region49: #{tpu_custom_call.1} parent=5 // pred_check
        %p2359 = pneg %p2358
      $region50: #{tpu_custom_call.1} parent=5 // pred_check_branch
        %2361 = sbr.rel (%p2359) target = $region52
      $region51: #{tpu_custom_call.1} parent=5 // pred_region
        %s2362 = ssub.s32 %s15, 2
        // Predicated region
        $region53: #{tpu_custom_call.1} parent=51 // pred_check
          %p2363 = pneg %p175
        $region54: #{tpu_custom_call.1} parent=51 // pred_check_branch
          %2365 = sbr.rel (%p2363) target = $region56
        $region55: #{tpu_custom_call.1} parent=51 // pred_region
          %s2366 = sand.u32 %s160, 1
          %s2367 = scalar_lea.sflag [#allocation4], %s2366
          %s2368 = sand.u32 %s160, 1
          %s2369 = smul.addr %s2368, 8
          %s2370 = scalar_lea.vmem [#allocation3], %s2369
          %2371 = dma.done %s2367, 128
        $region56: #{tpu_custom_call.1} parent=51 // pred_fallthru
          _
      $region52: #{tpu_custom_call.1} parent=5 // pred_fallthru
        _
    $region6: #{tpu_custom_call.1} parent=1 // loop_footer
      %s19 = sadd.s32 1, %s15
    $region7: #{tpu_custom_call.1} parent=1 // loop_footer_branch
      %14 = sbr.rel target = $region3
    $region8: #{tpu_custom_call.1} parent=1 // loop_exit
      _
    %2372 = vsyncpa [#allocation4], 1
    %s2373 = scalar_lea.sflag [#allocation4], 1
    %2374 = vsyncpa %s2373, 1

</llo_original>
